<compile_context>
chip_gen: v6e
topology: v6e:2x2x1
jax: 0.10.0
libtpu: 0.0.40
codegen_flags: <defaults>
</compile_context>

<pallas_src>
import functools

import jax
import jax.numpy as jnp
from jax import lax
from jax.experimental import pallas as pl
from jax.experimental.pallas import tpu as pltpu


# ---------------------------------------------------------------------------
# Fused kernel: all four layers for one batch-tile, activations VMEM-resident
# ---------------------------------------------------------------------------

def _fused_meg_kernel(x_ref, w1_ref, w2_ref, w3_ref, w4_ref, o_ref, *,
                      L, layer_meta, n_out, neg_slope):
    N = x_ref.shape[1]                                   # TB * L lanes
    act = x_ref[...].astype(jnp.float32)                 # [Cin0, N]

    # Hoisted, shared validity masks: one iota for the whole kernel, one-sided
    # compare per distinct shift.  lane = b*L + t_local; reading x[t_local + d]
    # is valid iff t_local + d in [0, L)  (also kills cross-segment roll leak).
    t_local = lax.broadcasted_iota(jnp.int32, (1, N), 1) % L
    max_pad = max((K - 1) // 2 for K, _, _ in layer_meta)
    masks = {}
    for d in range(1, max_pad + 1):
        masks[d] = t_local < (L - d)                     # d > 0: read x[t+d]
        masks[-d] = t_local >= d                         # d < 0: read x[t-|d|]
    ones_row = jnp.ones((1, N), jnp.float32)             # bias row (folded bias)

    w_refs = (w1_ref, w2_ref, w3_ref, w4_ref)
    for (K, rows_pad, apply_act), w_ref in zip(layer_meta, w_refs):
        pad = (K - 1) // 2
        cols = []
        for k in range(K):                               # row block = k*Cin + i
            d = k - pad
            if d == 0:
                cols.append(act)
            else:
                rolled = pltpu.roll(act, shift=(-d) % N, axis=1)   # XLU rotate
                cols.append(jnp.where(masks[d], rolled, 0.0))
        cols.append(ones_row)                            # bias folded into matmul
        if rows_pad:
            cols.append(jnp.zeros((rows_pad, N), jnp.float32))
        stack = jnp.concatenate(cols, axis=0)            # [rows, N]

        lhs = w_ref[...]
        rhs = stack.astype(lhs.dtype)                    # bf16 only if opted in
        y = jnp.dot(lhs, rhs, preferred_element_type=jnp.float32)   # one MXU matmul
        if apply_act:
            y = jnp.maximum(y, neg_slope * y)            # LeakyReLU(0.2), 2 VPU ops
        act = y

    o_ref[...] = act[:n_out, :]                          # drop Cout padding rows


# ---------------------------------------------------------------------------
# Trace-time parameter packing (BN fold + bias fold + padding), done once
# ---------------------------------------------------------------------------

def _round_up(v, m):
    return -(-v // m) * m


def fuse_params(params, mxu_dtype=jnp.float32):
    """Fold eval-mode BN into the conv weights, fold the bias into an extra
    weight column (matching the constant-1 row of the in-kernel stack), and pad
    contraction rows (and the last layer's Cout) to multiples of 8.

    mxu_dtype=jnp.bfloat16 enables bf16 MXU inputs (f32 accumulate); default is
    f32 to preserve the 1e-4 parity with the PyTorch reference."""
    names = ("conv1", "conv2", "conv3", "conv4")
    fused = []
    for li, name in enumerate(names):
        w, b, scale, shift = params[name]
        cout, cin, k = w.shape
        wf = (w * scale[:, None, None]).astype(jnp.float32)          # BN scale fold
        bf = (b * scale + shift).astype(jnp.float32)                 # BN shift fold
        w_mat = jnp.transpose(wf, (0, 2, 1)).reshape(cout, k * cin)  # col = k*Cin + i
        w_mat = jnp.concatenate([w_mat, bf[:, None]], axis=1)        # bias column
        rows = k * cin + 1
        rows_pad = _round_up(rows, 8) - rows
        if rows_pad:
            w_mat = jnp.pad(w_mat, ((0, 0), (0, rows_pad)))
        if li == len(names) - 1:                                     # last layer only
            cout_pad = _round_up(max(cout, 8), 8)
            if cout_pad > cout:
                w_mat = jnp.pad(w_mat, ((0, cout_pad - cout), (0, 0)))
        fused.append(dict(w=w_mat.astype(mxu_dtype), K=k,
                          rows_pad=rows_pad, apply_act=(li < 3)))
    return fused


# ---------------------------------------------------------------------------
# Forward pass (single pallas_call, batch packed into lanes)
# ---------------------------------------------------------------------------

def meg_model_wrapper_forward(x, fused, batch_tile=None):
    """Pallas forward for MEGModelWrapper(model_type='simple').forward(x)."""
    B, c0, L = x.shape
    if batch_tile is None:
        # widen the MXU RHS to >=256 lanes when possible, cap VMEM for long L
        batch_tile = max(1, min(B, 2048 // L if L <= 2048 else 1))
    TB = batch_tile
    Bp = _round_up(B, TB)
    xp = x if Bp == B else jnp.pad(x, ((0, Bp - B), (0, 0), (0, 0)))

    # Pack batch into the lane dimension: (B, C0, L) -> (C0, B*L).
    x2 = jnp.transpose(xp, (1, 0, 2)).reshape(c0, Bp * L)

    layer_meta = tuple((f["K"], f["rows_pad"], f["apply_act"]) for f in fused)
    kern = functools.partial(_fused_meg_kernel, L=L, layer_meta=layer_meta,
                             n_out=c0, neg_slope=0.2)

    weight_args = [f["w"] for f in fused]
    in_specs = [pl.BlockSpec((c0, TB * L), lambda g: (0, g))]        # packed signal
    for f in fused:
        in_specs.append(pl.BlockSpec(f["w"].shape, lambda g: (0, 0)))  # weights (whole)

    out2 = pl.pallas_call(
        kern,
        out_shape=jax.ShapeDtypeStruct((c0, Bp * L), jnp.float32),
        grid_spec=pltpu.PrefetchScalarGridSpec(
            num_scalar_prefetch=0,
            grid=(Bp // TB,),
            in_specs=in_specs,
            out_specs=pl.BlockSpec((c0, TB * L), lambda g: (0, g)),
        ),
        compiler_params=pltpu.CompilerParams(
            dimension_semantics=("parallel",)),
    )(x2, *weight_args)

    out = out2.reshape(c0, Bp, L).transpose(1, 0, 2)     # back to (B, C0, L)
    return out[:B]


# ---------------------------------------------------------------------------
# Synthetic parameters + pure-JAX reference
# ---------------------------------------------------------------------------

def make_params(key, n_channels=1):
    """Deterministic synthetic parameters matching SimpleMEGDenoiser's shapes."""
    layer_defs = [
        ("conv1", n_channels, 64, 7, True),
        ("conv2", 64, 128, 5, True),
        ("conv3", 128, 64, 5, True),
        ("conv4", 64, n_channels, 7, False),
    ]
    params = {}
    for name, cin, cout, k, has_bn in layer_defs:
        key, k1, k2, k3, k4, k5, k6 = jax.random.split(key, 7)
        bound = 1.0 / jnp.sqrt(cin * k)
        w = jax.random.uniform(k1, (cout, cin, k), jnp.float32, -bound, bound)
        b = jax.random.uniform(k2, (cout,), jnp.float32, -bound, bound)
        if has_bn:
            gamma = 1.0 + 0.1 * jax.random.normal(k3, (cout,), jnp.float32)
            beta = 0.1 * jax.random.normal(k4, (cout,), jnp.float32)
            r_mean = 0.1 * jax.random.normal(k5, (cout,), jnp.float32)
            r_var = 1.0 + 0.1 * jax.random.uniform(k6, (cout,), jnp.float32)
            scale = gamma / jnp.sqrt(r_var + 1e-5)
            shift = beta - r_mean * scale
        else:
            scale = jnp.ones((cout,), jnp.float32)
            shift = jnp.zeros((cout,), jnp.float32)
        params[name] = (w, b, scale, shift)
    return params


def ref_forward(x, params):
    """Pure-JAX reference (lax conv) for correctness checking."""
    def layer(x, w, b, scale, shift, act):
        pad = (w.shape[2] - 1) // 2
        y = lax.conv_general_dilated(
            x, w, window_strides=(1,), padding=[(pad, pad)],
            dimension_numbers=("NCH", "OIH", "NCH"))
        y = y + b[None, :, None]
        y = y * scale[None, :, None] + shift[None, :, None]
        if act:
            y = jnp.where(y > 0, y, 0.2 * y)
        return y

    x = layer(x, *params["conv1"], True)
    x = layer(x, *params["conv2"], True)
    x = layer(x, *params["conv3"], True)
    x = layer(x, *params["conv4"], False)
    return x


if __name__ == "__main__":
    key = jax.random.PRNGKey(0)
    pkey, xkey = jax.random.split(key)

    n_channels, batch, length = 1, 2, 128
    params = make_params(pkey, n_channels=n_channels)
    fused = fuse_params(params)                      # BN/bias folding + packing: once
    x = jax.random.normal(xkey, (batch, n_channels, length), jnp.float32)

    out = meg_model_wrapper_forward(x, fused)
    out = jax.block_until_ready(out)

    ref = jax.block_until_ready(ref_forward(x, params))
    assert out.shape == (batch, n_channels, length), out.shape
    assert jnp.allclose(out, ref, rtol=1e-4, atol=1e-4), \
        float(jnp.max(jnp.abs(out - ref)))

    print("KERNEL_OK")
</pallas_src>

<mosaic_0001>
module attributes {stable_mosaic.version = 11 : i64} {
  func.func @_fused_meg_kernel(%arg0: i32, %arg1: memref<1x256xf32, #tpu.memory_space<vmem>>, %arg2: memref<64x8xf32, #tpu.memory_space<vmem>>, %arg3: memref<128x328xf32, #tpu.memory_space<vmem>>, %arg4: memref<64x648xf32, #tpu.memory_space<vmem>>, %arg5: memref<8x456xf32, #tpu.memory_space<vmem>>, %arg6: memref<1x256xf32, #tpu.memory_space<vmem>>) attributes {dimension_semantics = [#tpu.dimension_semantics<parallel>], iteration_bounds = array<i64: 1>, scalar_prefetch = 0 : i64, scratch_operands = 0 : i64, tpu.core_type = #tpu.core_type<tc>, window_params = [{transform_indices = @transform_0, window_bounds = array<i64: 1, 256>}, {pipeline_mode = #tpu.pipeline_mode<synchronous>, transform_indices = @transform_1, window_bounds = array<i64: 64, 8>}, {pipeline_mode = #tpu.pipeline_mode<synchronous>, transform_indices = @transform_2, window_bounds = array<i64: 128, 328>}, {pipeline_mode = #tpu.pipeline_mode<synchronous>, transform_indices = @transform_3, window_bounds = array<i64: 64, 648>}, {pipeline_mode = #tpu.pipeline_mode<synchronous>, transform_indices = @transform_4, window_bounds = array<i64: 8, 456>}, {transform_indices = @transform_5, window_bounds = array<i64: 1, 256>}]} {
    %c0 = arith.constant 0 : index
    %c0_0 = arith.constant 0 : index
    %0 = vector.load %arg1[%c0, %c0_0] : memref<1x256xf32, #tpu.memory_space<vmem>>, vector<1x256xf32>
    %1 = tpu.iota {dimensions = array<i32: 1>} : vector<1x256xi32>
    %c128_i32 = arith.constant 128 : i32
    %c0_i32 = arith.constant 0 : i32
    %2 = arith.cmpi eq, %c128_i32, %c0_i32 : i32
    %c1_i32 = arith.constant 1 : i32
    %3 = arith.select %2, %c1_i32, %c128_i32 : i32
    %4 = vector.broadcast %3 : i32 to vector<1x256xi32>
    %5 = arith.remsi %1, %4 : vector<1x256xi32>
    %c0_i32_1 = arith.constant 0 : i32
    %6 = vector.broadcast %c0_i32_1 : i32 to vector<1x256xi32>
    %7 = arith.cmpi ne, %5, %6 : vector<1x256xi32>
    %c0_i32_2 = arith.constant 0 : i32
    %8 = vector.broadcast %c0_i32_2 : i32 to vector<1x256xi32>
    %9 = arith.cmpi slt, %5, %8 : vector<1x256xi32>
    %c0_i32_3 = arith.constant 0 : i32
    %10 = arith.cmpi slt, %3, %c0_i32_3 : i32
    %11 = vector.broadcast %10 : i1 to vector<1x256xi1>
    %12 = vector.broadcast %11 : vector<1x256xi1> to vector<1x256xi1>
    %13 = arith.xori %9, %12 : vector<1x256xi1>
    %14 = arith.andi %13, %7 : vector<1x256xi1>
    %15 = vector.broadcast %3 : i32 to vector<1x256xi32>
    %16 = arith.addi %5, %15 : vector<1x256xi32>
    %17 = arith.select %14, %16, %5 : vector<1x256xi1>, vector<1x256xi32>
    %c127_i32 = arith.constant 127 : i32
    %18 = vector.broadcast %c127_i32 : i32 to vector<1x256xi32>
    %19 = arith.cmpi slt, %17, %18 : vector<1x256xi32>
    %c1_i32_4 = arith.constant 1 : i32
    %20 = vector.broadcast %c1_i32_4 : i32 to vector<1x256xi32>
    %21 = arith.cmpi sge, %17, %20 : vector<1x256xi32>
    %c126_i32 = arith.constant 126 : i32
    %22 = vector.broadcast %c126_i32 : i32 to vector<1x256xi32>
    %23 = arith.cmpi slt, %17, %22 : vector<1x256xi32>
    %c2_i32 = arith.constant 2 : i32
    %24 = vector.broadcast %c2_i32 : i32 to vector<1x256xi32>
    %25 = arith.cmpi sge, %17, %24 : vector<1x256xi32>
    %c125_i32 = arith.constant 125 : i32
    %26 = vector.broadcast %c125_i32 : i32 to vector<1x256xi32>
    %27 = arith.cmpi slt, %17, %26 : vector<1x256xi32>
    %c3_i32 = arith.constant 3 : i32
    %28 = vector.broadcast %c3_i32 : i32 to vector<1x256xi32>
    %29 = arith.cmpi sge, %17, %28 : vector<1x256xi32>
    %cst = arith.constant 1.000000e+00 : f32
    %30 = vector.broadcast %cst : f32 to vector<1x256xf32>
    %c3_i32_5 = arith.constant 3 : i32
    %31 = tpu.dynamic_rotate %0 by %c3_i32_5 dim 1 : vector<1x256xf32>, i32 -> vector<1x256xf32>
    %cst_6 = arith.constant 0.000000e+00 : f32
    %32 = vector.broadcast %cst_6 : f32 to vector<1x256xf32>
    %33 = arith.select %29, %31, %32 : vector<1x256xi1>, vector<1x256xf32>
    %c2_i32_7 = arith.constant 2 : i32
    %34 = tpu.dynamic_rotate %0 by %c2_i32_7 dim 1 : vector<1x256xf32>, i32 -> vector<1x256xf32>
    %cst_8 = arith.constant 0.000000e+00 : f32
    %35 = vector.broadcast %cst_8 : f32 to vector<1x256xf32>
    %36 = arith.select %25, %34, %35 : vector<1x256xi1>, vector<1x256xf32>
    %c1_i32_9 = arith.constant 1 : i32
    %37 = tpu.dynamic_rotate %0 by %c1_i32_9 dim 1 : vector<1x256xf32>, i32 -> vector<1x256xf32>
    %cst_10 = arith.constant 0.000000e+00 : f32
    %38 = vector.broadcast %cst_10 : f32 to vector<1x256xf32>
    %39 = arith.select %21, %37, %38 : vector<1x256xi1>, vector<1x256xf32>
    %c255_i32 = arith.constant 255 : i32
    %40 = tpu.dynamic_rotate %0 by %c255_i32 dim 1 : vector<1x256xf32>, i32 -> vector<1x256xf32>
    %cst_11 = arith.constant 0.000000e+00 : f32
    %41 = vector.broadcast %cst_11 : f32 to vector<1x256xf32>
    %42 = arith.select %19, %40, %41 : vector<1x256xi1>, vector<1x256xf32>
    %c254_i32 = arith.constant 254 : i32
    %43 = tpu.dynamic_rotate %0 by %c254_i32 dim 1 : vector<1x256xf32>, i32 -> vector<1x256xf32>
    %cst_12 = arith.constant 0.000000e+00 : f32
    %44 = vector.broadcast %cst_12 : f32 to vector<1x256xf32>
    %45 = arith.select %23, %43, %44 : vector<1x256xi1>, vector<1x256xf32>
    %c253_i32 = arith.constant 253 : i32
    %46 = tpu.dynamic_rotate %0 by %c253_i32 dim 1 : vector<1x256xf32>, i32 -> vector<1x256xf32>
    %cst_13 = arith.constant 0.000000e+00 : f32
    %47 = vector.broadcast %cst_13 : f32 to vector<1x256xf32>
    %48 = arith.select %27, %46, %47 : vector<1x256xi1>, vector<1x256xf32>
    %49 = tpu.concatenate %33, %36, %39, %0, %42, %45, %48, %30 in 0 : vector<1x256xf32>, vector<1x256xf32>, vector<1x256xf32>, vector<1x256xf32>, vector<1x256xf32>, vector<1x256xf32>, vector<1x256xf32>, vector<1x256xf32> -> vector<8x256xf32>
    %c0_14 = arith.constant 0 : index
    %c0_15 = arith.constant 0 : index
    %50 = vector.load %arg2[%c0_14, %c0_15] : memref<64x8xf32, #tpu.memory_space<vmem>>, vector<64x8xf32>
    %cst_16 = arith.constant dense<0.000000e+00> : vector<64x256xf32>
    %51 = tpu.matmul %50, %49, %cst_16 {dimension_numbers = #tpu.dot_dimension_numbers<[1], [0], [0], [1], [0, 0, 1, 1], [], []>} : vector<64x8xf32>, vector<8x256xf32>, vector<64x256xf32> -> vector<64x256xf32>
    %cst_17 = arith.constant 2.000000e-01 : f32
    %52 = vector.broadcast %cst_17 : f32 to vector<64x256xf32>
    %53 = arith.mulf %52, %51 : vector<64x256xf32>
    %54 = arith.maximumf %51, %53 : vector<64x256xf32>
    %c2_i32_18 = arith.constant 2 : i32
    %55 = tpu.dynamic_rotate %54 by %c2_i32_18 dim 1 : vector<64x256xf32>, i32 -> vector<64x256xf32>
    %cst_19 = arith.constant 0.000000e+00 : f32
    %56 = vector.shape_cast %25 : vector<1x256xi1> to vector<1x256xi1>
    %57 = vector.broadcast %56 : vector<1x256xi1> to vector<64x256xi1>
    %58 = vector.broadcast %cst_19 : f32 to vector<64x256xf32>
    %59 = arith.select %57, %55, %58 : vector<64x256xi1>, vector<64x256xf32>
    %c1_i32_20 = arith.constant 1 : i32
    %60 = tpu.dynamic_rotate %54 by %c1_i32_20 dim 1 : vector<64x256xf32>, i32 -> vector<64x256xf32>
    %cst_21 = arith.constant 0.000000e+00 : f32
    %61 = vector.shape_cast %21 : vector<1x256xi1> to vector<1x256xi1>
    %62 = vector.broadcast %61 : vector<1x256xi1> to vector<64x256xi1>
    %63 = vector.broadcast %cst_21 : f32 to vector<64x256xf32>
    %64 = arith.select %62, %60, %63 : vector<64x256xi1>, vector<64x256xf32>
    %c255_i32_22 = arith.constant 255 : i32
    %65 = tpu.dynamic_rotate %54 by %c255_i32_22 dim 1 : vector<64x256xf32>, i32 -> vector<64x256xf32>
    %cst_23 = arith.constant 0.000000e+00 : f32
    %66 = vector.shape_cast %19 : vector<1x256xi1> to vector<1x256xi1>
    %67 = vector.broadcast %66 : vector<1x256xi1> to vector<64x256xi1>
    %68 = vector.broadcast %cst_23 : f32 to vector<64x256xf32>
    %69 = arith.select %67, %65, %68 : vector<64x256xi1>, vector<64x256xf32>
    %c254_i32_24 = arith.constant 254 : i32
    %70 = tpu.dynamic_rotate %54 by %c254_i32_24 dim 1 : vector<64x256xf32>, i32 -> vector<64x256xf32>
    %cst_25 = arith.constant 0.000000e+00 : f32
    %71 = vector.shape_cast %23 : vector<1x256xi1> to vector<1x256xi1>
    %72 = vector.broadcast %71 : vector<1x256xi1> to vector<64x256xi1>
    %73 = vector.broadcast %cst_25 : f32 to vector<64x256xf32>
    %74 = arith.select %72, %70, %73 : vector<64x256xi1>, vector<64x256xf32>
    %cst_26 = arith.constant 0.000000e+00 : f32
    %75 = vector.broadcast %cst_26 : f32 to vector<7x256xf32>
    %76 = tpu.concatenate %59, %64, %54, %69, %74, %30, %75 in 0 : vector<64x256xf32>, vector<64x256xf32>, vector<64x256xf32>, vector<64x256xf32>, vector<64x256xf32>, vector<1x256xf32>, vector<7x256xf32> -> vector<328x256xf32>
    %c0_27 = arith.constant 0 : index
    %c0_28 = arith.constant 0 : index
    %77 = vector.load %arg3[%c0_27, %c0_28] : memref<128x328xf32, #tpu.memory_space<vmem>>, vector<128x328xf32>
    %cst_29 = arith.constant dense<0.000000e+00> : vector<128x256xf32>
    %78 = tpu.matmul %77, %76, %cst_29 {dimension_numbers = #tpu.dot_dimension_numbers<[1], [0], [0], [1], [0, 0, 1, 1], [], []>} : vector<128x328xf32>, vector<328x256xf32>, vector<128x256xf32> -> vector<128x256xf32>
    %cst_30 = arith.constant 2.000000e-01 : f32
    %79 = vector.broadcast %cst_30 : f32 to vector<128x256xf32>
    %80 = arith.mulf %79, %78 : vector<128x256xf32>
    %81 = arith.maximumf %78, %80 : vector<128x256xf32>
    %c2_i32_31 = arith.constant 2 : i32
    %82 = tpu.dynamic_rotate %81 by %c2_i32_31 dim 1 : vector<128x256xf32>, i32 -> vector<128x256xf32>
    %cst_32 = arith.constant 0.000000e+00 : f32
    %83 = vector.shape_cast %25 : vector<1x256xi1> to vector<1x256xi1>
    %84 = vector.broadcast %83 : vector<1x256xi1> to vector<128x256xi1>
    %85 = vector.broadcast %cst_32 : f32 to vector<128x256xf32>
    %86 = arith.select %84, %82, %85 : vector<128x256xi1>, vector<128x256xf32>
    %c1_i32_33 = arith.constant 1 : i32
    %87 = tpu.dynamic_rotate %81 by %c1_i32_33 dim 1 : vector<128x256xf32>, i32 -> vector<128x256xf32>
    %cst_34 = arith.constant 0.000000e+00 : f32
    %88 = vector.shape_cast %21 : vector<1x256xi1> to vector<1x256xi1>
    %89 = vector.broadcast %88 : vector<1x256xi1> to vector<128x256xi1>
    %90 = vector.broadcast %cst_34 : f32 to vector<128x256xf32>
    %91 = arith.select %89, %87, %90 : vector<128x256xi1>, vector<128x256xf32>
    %c255_i32_35 = arith.constant 255 : i32
    %92 = tpu.dynamic_rotate %81 by %c255_i32_35 dim 1 : vector<128x256xf32>, i32 -> vector<128x256xf32>
    %cst_36 = arith.constant 0.000000e+00 : f32
    %93 = vector.shape_cast %19 : vector<1x256xi1> to vector<1x256xi1>
    %94 = vector.broadcast %93 : vector<1x256xi1> to vector<128x256xi1>
    %95 = vector.broadcast %cst_36 : f32 to vector<128x256xf32>
    %96 = arith.select %94, %92, %95 : vector<128x256xi1>, vector<128x256xf32>
    %c254_i32_37 = arith.constant 254 : i32
    %97 = tpu.dynamic_rotate %81 by %c254_i32_37 dim 1 : vector<128x256xf32>, i32 -> vector<128x256xf32>
    %cst_38 = arith.constant 0.000000e+00 : f32
    %98 = vector.shape_cast %23 : vector<1x256xi1> to vector<1x256xi1>
    %99 = vector.broadcast %98 : vector<1x256xi1> to vector<128x256xi1>
    %100 = vector.broadcast %cst_38 : f32 to vector<128x256xf32>
    %101 = arith.select %99, %97, %100 : vector<128x256xi1>, vector<128x256xf32>
    %cst_39 = arith.constant 0.000000e+00 : f32
    %102 = vector.broadcast %cst_39 : f32 to vector<7x256xf32>
    %103 = tpu.concatenate %86, %91, %81, %96, %101, %30, %102 in 0 : vector<128x256xf32>, vector<128x256xf32>, vector<128x256xf32>, vector<128x256xf32>, vector<128x256xf32>, vector<1x256xf32>, vector<7x256xf32> -> vector<648x256xf32>
    %c0_40 = arith.constant 0 : index
    %c0_41 = arith.constant 0 : index
    %104 = vector.load %arg4[%c0_40, %c0_41] : memref<64x648xf32, #tpu.memory_space<vmem>>, vector<64x648xf32>
    %cst_42 = arith.constant dense<0.000000e+00> : vector<64x256xf32>
    %105 = tpu.matmul %104, %103, %cst_42 {dimension_numbers = #tpu.dot_dimension_numbers<[1], [0], [0], [1], [0, 0, 1, 1], [], []>} : vector<64x648xf32>, vector<648x256xf32>, vector<64x256xf32> -> vector<64x256xf32>
    %cst_43 = arith.constant 2.000000e-01 : f32
    %106 = vector.broadcast %cst_43 : f32 to vector<64x256xf32>
    %107 = arith.mulf %106, %105 : vector<64x256xf32>
    %108 = arith.maximumf %105, %107 : vector<64x256xf32>
    %c3_i32_44 = arith.constant 3 : i32
    %109 = tpu.dynamic_rotate %108 by %c3_i32_44 dim 1 : vector<64x256xf32>, i32 -> vector<64x256xf32>
    %cst_45 = arith.constant 0.000000e+00 : f32
    %110 = vector.shape_cast %29 : vector<1x256xi1> to vector<1x256xi1>
    %111 = vector.broadcast %110 : vector<1x256xi1> to vector<64x256xi1>
    %112 = vector.broadcast %cst_45 : f32 to vector<64x256xf32>
    %113 = arith.select %111, %109, %112 : vector<64x256xi1>, vector<64x256xf32>
    %c2_i32_46 = arith.constant 2 : i32
    %114 = tpu.dynamic_rotate %108 by %c2_i32_46 dim 1 : vector<64x256xf32>, i32 -> vector<64x256xf32>
    %cst_47 = arith.constant 0.000000e+00 : f32
    %115 = vector.shape_cast %25 : vector<1x256xi1> to vector<1x256xi1>
    %116 = vector.broadcast %115 : vector<1x256xi1> to vector<64x256xi1>
    %117 = vector.broadcast %cst_47 : f32 to vector<64x256xf32>
    %118 = arith.select %116, %114, %117 : vector<64x256xi1>, vector<64x256xf32>
    %c1_i32_48 = arith.constant 1 : i32
    %119 = tpu.dynamic_rotate %108 by %c1_i32_48 dim 1 : vector<64x256xf32>, i32 -> vector<64x256xf32>
    %cst_49 = arith.constant 0.000000e+00 : f32
    %120 = vector.shape_cast %21 : vector<1x256xi1> to vector<1x256xi1>
    %121 = vector.broadcast %120 : vector<1x256xi1> to vector<64x256xi1>
    %122 = vector.broadcast %cst_49 : f32 to vector<64x256xf32>
    %123 = arith.select %121, %119, %122 : vector<64x256xi1>, vector<64x256xf32>
    %c255_i32_50 = arith.constant 255 : i32
    %124 = tpu.dynamic_rotate %108 by %c255_i32_50 dim 1 : vector<64x256xf32>, i32 -> vector<64x256xf32>
    %cst_51 = arith.constant 0.000000e+00 : f32
    %125 = vector.shape_cast %19 : vector<1x256xi1> to vector<1x256xi1>
    %126 = vector.broadcast %125 : vector<1x256xi1> to vector<64x256xi1>
    %127 = vector.broadcast %cst_51 : f32 to vector<64x256xf32>
    %128 = arith.select %126, %124, %127 : vector<64x256xi1>, vector<64x256xf32>
    %c254_i32_52 = arith.constant 254 : i32
    %129 = tpu.dynamic_rotate %108 by %c254_i32_52 dim 1 : vector<64x256xf32>, i32 -> vector<64x256xf32>
    %cst_53 = arith.constant 0.000000e+00 : f32
    %130 = vector.shape_cast %23 : vector<1x256xi1> to vector<1x256xi1>
    %131 = vector.broadcast %130 : vector<1x256xi1> to vector<64x256xi1>
    %132 = vector.broadcast %cst_53 : f32 to vector<64x256xf32>
    %133 = arith.select %131, %129, %132 : vector<64x256xi1>, vector<64x256xf32>
    %c253_i32_54 = arith.constant 253 : i32
    %134 = tpu.dynamic_rotate %108 by %c253_i32_54 dim 1 : vector<64x256xf32>, i32 -> vector<64x256xf32>
    %cst_55 = arith.constant 0.000000e+00 : f32
    %135 = vector.shape_cast %27 : vector<1x256xi1> to vector<1x256xi1>
    %136 = vector.broadcast %135 : vector<1x256xi1> to vector<64x256xi1>
    %137 = vector.broadcast %cst_55 : f32 to vector<64x256xf32>
    %138 = arith.select %136, %134, %137 : vector<64x256xi1>, vector<64x256xf32>
    %cst_56 = arith.constant 0.000000e+00 : f32
    %139 = vector.broadcast %cst_56 : f32 to vector<7x256xf32>
    %140 = tpu.concatenate %113, %118, %123, %108, %128, %133, %138, %30, %139 in 0 : vector<64x256xf32>, vector<64x256xf32>, vector<64x256xf32>, vector<64x256xf32>, vector<64x256xf32>, vector<64x256xf32>, vector<64x256xf32>, vector<1x256xf32>, vector<7x256xf32> -> vector<456x256xf32>
    %c0_57 = arith.constant 0 : index
    %c0_58 = arith.constant 0 : index
    %141 = vector.load %arg5[%c0_57, %c0_58] : memref<8x456xf32, #tpu.memory_space<vmem>>, vector<8x456xf32>
    %cst_59 = arith.constant dense<0.000000e+00> : vector<8x256xf32>
    %142 = tpu.matmul %141, %140, %cst_59 {dimension_numbers = #tpu.dot_dimension_numbers<[1], [0], [0], [1], [0, 0, 1, 1], [], []>} : vector<8x456xf32>, vector<456x256xf32>, vector<8x256xf32> -> vector<8x256xf32>
    %143 = vector.extract_strided_slice %142 {offsets = [0, 0], sizes = [1, 256], strides = [1, 1]} : vector<8x256xf32> to vector<1x256xf32>
    %c0_60 = arith.constant 0 : index
    %c0_61 = arith.constant 0 : index
    %144 = vector.load %arg6[%c0_60, %c0_61] : memref<1x256xf32, #tpu.memory_space<vmem>>, vector<1x256xf32>
    tpu.vector_store %arg6[%c0_60, %c0_61], %143 {strides = array<i32>} : memref<1x256xf32, #tpu.memory_space<vmem>>, vector<1x256xf32>,
    return
  }
  func.func @transform_0(%arg0: i32) -> (i32, i32) {
    %c0_i32 = arith.constant 0 : i32
    %c0_i32_0 = arith.constant 0 : i32
    return %c0_i32, %arg0 : i32, i32
  }
  func.func @transform_1(%arg0: i32) -> (i32, i32) {
    %c0_i32 = arith.constant 0 : i32
    %c0_i32_0 = arith.constant 0 : i32
    %c0_i32_1 = arith.constant 0 : i32
    return %c0_i32, %c0_i32_0 : i32, i32
  }
  func.func @transform_2(%arg0: i32) -> (i32, i32) {
    %c0_i32 = arith.constant 0 : i32
    %c0_i32_0 = arith.constant 0 : i32
    %c0_i32_1 = arith.constant 0 : i32
    return %c0_i32, %c0_i32_0 : i32, i32
  }
  func.func @transform_3(%arg0: i32) -> (i32, i32) {
    %c0_i32 = arith.constant 0 : i32
    %c0_i32_0 = arith.constant 0 : i32
    %c0_i32_1 = arith.constant 0 : i32
    return %c0_i32, %c0_i32_0 : i32, i32
  }
  func.func @transform_4(%arg0: i32) -> (i32, i32) {
    %c0_i32 = arith.constant 0 : i32
    %c0_i32_0 = arith.constant 0 : i32
    %c0_i32_1 = arith.constant 0 : i32
    return %c0_i32, %c0_i32_0 : i32, i32
  }
  func.func @transform_5(%arg0: i32) -> (i32, i32) {
    %c0_i32 = arith.constant 0 : i32
    %c0_i32_0 = arith.constant 0 : i32
    return %c0_i32, %arg0 : i32, i32
  }
}

</mosaic_0001>

<llo_original>
// kernel: tpu_custom_call.1
$region0: #{tpu_custom_call.1}
  #allocation0 [shape = 'u32[]', space=smem, size = 0x4, offset = 0x4, fixed_abs, tag = 'smem constant byte address 0x4 - core index']
  #allocation1 [shape = 'u32[144,128]{1,0:T(1,128)}', space=vmem, size = 0x12000, scoped, tag = 'internal scratch']
  %s0 = inlined_call_operand.vmem [shape: f32[1,256], index: 0, kind: input, shape index: {}]
  %s1 = inlined_call_operand.vmem [shape: f32[64,8], index: 1, kind: input, shape index: {}]
  %s2 = inlined_call_operand.vmem [shape: f32[128,328], index: 2, kind: input, shape index: {}]
  %s3 = inlined_call_operand.vmem [shape: f32[64,648], index: 3, kind: input, shape index: {}]
  %s4 = inlined_call_operand.vmem [shape: f32[8,456], index: 4, kind: input, shape index: {}]
  %s5 = inlined_call_operand.hbm [shape: f32[1,256], index: 5, kind: output, shape index: {}]
  %s6 = sld [smem:[#allocation0]]
  $region30: #{tpu_custom_call.1} parent=0
    _
  %s8 = ssub.s32 1, %s6
  %s9 = scalar_select 0, %s8, %s6
  $region1: #{tpu_custom_call.1} parent=0
    #allocation2 [shape = 'u8[1024]{0}', space=vmem, size = 0x400, scoped, tag = 'output window, operand 0, single buffered']
    #allocation3 [shape = 's32[1]{0}', space=sflag, size = 0x4, scoped, tag = 'scoped memory for tpu_custom_call.1']
    %10 = vsyncpa [#allocation3], 0
    // Predicated region
    $region2: #{tpu_custom_call.1} parent=1 // pred_check
      _
    $region3: #{tpu_custom_call.1} parent=1 // pred_check_branch
      %12 = sbr.rel (0) target = $region5
    $region4: #{tpu_custom_call.1} parent=1 // pred_region
      _
    $region5: #{tpu_custom_call.1} parent=1 // pred_fallthru
      _
    // Predicated region
    $region6: #{tpu_custom_call.1} parent=1 // pred_check
      _
    $region7: #{tpu_custom_call.1} parent=1 // pred_check_branch
      %14 = sbr.rel (0) target = $region9
    $region8: #{tpu_custom_call.1} parent=1 // pred_region
      _
    $region9: #{tpu_custom_call.1} parent=1 // pred_fallthru
      _
    // Predicated region
    $region10: #{tpu_custom_call.1} parent=1 // pred_check
      _
    $region11: #{tpu_custom_call.1} parent=1 // pred_check_branch
      %16 = sbr.rel (0) target = $region13
    $region12: #{tpu_custom_call.1} parent=1 // pred_region
      _
    $region13: #{tpu_custom_call.1} parent=1 // pred_fallthru
      _
    // Predicated region
    $region14: #{tpu_custom_call.1} parent=1 // pred_check
      _
    $region15: #{tpu_custom_call.1} parent=1 // pred_check_branch
      %18 = sbr.rel (0) target = $region17
    $region16: #{tpu_custom_call.1} parent=1 // pred_region
      _
    $region17: #{tpu_custom_call.1} parent=1 // pred_fallthru
      _
    // Predicated region
    $region18: #{tpu_custom_call.1} parent=1 // pred_check
      _
    $region19: #{tpu_custom_call.1} parent=1 // pred_check_branch
      %20 = sbr.rel (0) target = $region21
    $region20: #{tpu_custom_call.1} parent=1 // pred_region
      _
    $region21: #{tpu_custom_call.1} parent=1 // pred_fallthru
      _
    %v21 = vld [vmem:[%s0] sm:$0x3]
    %v22 = vlaneseq
    %v23 = vand.u32 %v22, 127
    %v24 = vadd.s32 %v23, 128
    %vm25 = vcmp.lt.s32.totalorder %v23, 0
    %v26 = vsub.s32 0, %v23
    %v27 = vsel %vm25, %v26, %v23
    %v28 = vshrl.u32 %v27, 7
    %v29 = vand.u32 %v27, 127
    %v30 = vsub.s32 0, %v29
    %v31 = vsel %vm25, %v30, %v29
    %vm32 = vcmp.lt.s32.totalorder %v24, 0
    %v33 = vsub.s32 0, %v24
    %v34 = vsel %vm32, %v33, %v24
    %v35 = vshrl.u32 %v34, 7
    %v36 = vand.u32 %v34, 127
    %v37 = vsub.s32 0, %v36
    %v38 = vsel %vm32, %v37, %v36
    %vm39 = vcmp.ne.s32.totalorder %v31, 0
    %vm40 = vcmp.ne.s32.totalorder %v38, 0
    %vm41 = vcmp.lt.s32.totalorder %v31, 0
    %vm42 = vcmp.lt.s32.totalorder %v38, 0
    %vm43 = vmand %vm41, %vm39
    %vm44 = vmand %vm42, %vm40
    %v45 = vadd.s32 %v31, 128
    %v46 = vadd.s32 %v38, 128
    %v47 = vsel %vm43, %v45, %v31
    %v48 = vsel %vm44, %v46, %v38
    %vm49 = vcmp.lt.s32.totalorder %v47, 127
    %vm50 = vcmp.lt.s32.totalorder %v48, 127
    %vm51 = vcmp.ge.s32.totalorder %v47, 1
    %vm52 = vcmp.ge.s32.totalorder %v48, 1
    %vm53 = vcmp.lt.s32.totalorder %v47, 126
    %vm54 = vcmp.lt.s32.totalorder %v48, 126
    %vm55 = vcmp.ge.s32.totalorder %v47, 2
    %vm56 = vcmp.ge.s32.totalorder %v48, 2
    %vm57 = vcmp.lt.s32.totalorder %v47, 125
    %vm58 = vcmp.lt.s32.totalorder %v48, 125
    %vm59 = vcmp.ge.s32.totalorder %v47, 3
    %vm60 = vcmp.ge.s32.totalorder %v48, 3
    %v62 = vlaneseq
    %v63 = vshrl.u32 %v62, 7
    %v64 = vsub.s32 0, %v63
    %v65 = vrot.slane %v21, %v64
    %v66 = vlaneseq
    %v67 = vshrl.u32 %v66, 7
    %v68 = vsub.s32 1, %v67
    %v69 = vrot.slane %v21, %v68
    %72 = vrot.lane.b32.xlu0 %v65, 3
    %v73 = vpop.permute.xlu0 %72
    %74 = vrot.lane.b32.xlu0 %v69, 3
    %v75 = vpop.permute.xlu0 %74
    %vm76 = vcmp.lt.s32.totalorder %v23, 3
    %v77 = vsel %vm76, %v73, %v75
    %v78 = vsel %vm76, %v75, %v73
    %v79 = vsel %vm59, %v78, 0.0
    %v80 = vsel %vm60, %v77, 0.0
    %81 = vrot.lane.b32.xlu0 %v65, 2
    %v82 = vpop.permute.xlu0 %81
    %83 = vrot.lane.b32.xlu0 %v69, 2
    %v84 = vpop.permute.xlu0 %83
    %vm85 = vcmp.lt.s32.totalorder %v23, 2
    %v86 = vsel %vm85, %v82, %v84
    %v87 = vsel %vm85, %v84, %v82
    %v88 = vsel %vm55, %v87, 0.0
    %v89 = vsel %vm56, %v86, 0.0
    %90 = vrot.lane.b32.xlu0 %v65, 1
    %v91 = vpop.permute.xlu0 %90
    %92 = vrot.lane.b32.xlu0 %v69, 1
    %v93 = vpop.permute.xlu0 %92
    %vm94 = vcmp.lt.s32.totalorder %v23, 1
    %v95 = vsel %vm94, %v91, %v93
    %v96 = vsel %vm94, %v93, %v91
    %v97 = vsel %vm51, %v96, 0.0
    %v98 = vsel %vm52, %v95, 0.0
    %99 = vrot.lane.b32.xlu0 %v65, 127
    %v100 = vpop.permute.xlu0 %99
    %101 = vrot.lane.b32.xlu0 %v69, 127
    %v102 = vpop.permute.xlu0 %101
    %vm103 = vcmp.lt.s32.totalorder %v23, 127
    %v104 = vsel %vm103, %v100, %v102
    %v105 = vsel %vm103, %v102, %v100
    %v106 = vsel %vm49, %v104, 0.0
    %v107 = vsel %vm50, %v105, 0.0
    %108 = vrot.lane.b32.xlu0 %v65, 126
    %v109 = vpop.permute.xlu0 %108
    %110 = vrot.lane.b32.xlu0 %v69, 126
    %v111 = vpop.permute.xlu0 %110
    %vm112 = vcmp.lt.s32.totalorder %v23, 126
    %v113 = vsel %vm112, %v109, %v111
    %v114 = vsel %vm112, %v111, %v109
    %v115 = vsel %vm53, %v113, 0.0
    %v116 = vsel %vm54, %v114, 0.0
    %117 = vrot.lane.b32.xlu0 %v65, 125
    %v118 = vpop.permute.xlu0 %117
    %119 = vrot.lane.b32.xlu0 %v69, 125
    %v120 = vpop.permute.xlu0 %119
    %vm121 = vcmp.lt.s32.totalorder %v23, 125
    %v122 = vsel %vm121, %v118, %v120
    %v123 = vsel %vm121, %v120, %v118
    %v124 = vsel %vm57, %v122, 0.0
    %v125 = vsel %vm58, %v123, 0.0
    %v128 = vrot.slane %v88, 7
    %v129 = vrot.slane %v89, 7
    %v134 = vrot.slane %v97, 6
    %v135 = vrot.slane %v98, 6
    %v140 = vrot.slane %v106, 4
    %v141 = vrot.slane %v107, 4
    %v146 = vrot.slane %v115, 3
    %v147 = vrot.slane %v116, 3
    %v152 = vrot.slane %v124, 2
    %v153 = vrot.slane %v125, 2
    %vm156 = vcmask 1040384
    %v157 = vsel %vm156, %v79, %v128
    %v158 = vsel %vm156, %v80, %v129
    %vm159 = vcmask 1041408
    %v160 = vsel %vm159, %v157, %v134
    %v161 = vsel %vm159, %v158, %v135
    %vm162 = vcmask 1042432
    %v163 = vsel %vm162, %v160, %v65
    %v164 = vsel %vm162, %v161, %v69
    %vm165 = vcmask 1043456
    %v166 = vsel %vm165, %v163, %v140
    %v167 = vsel %vm165, %v164, %v141
    %vm168 = vcmask 1044480
    %v169 = vsel %vm168, %v166, %v146
    %v170 = vsel %vm168, %v167, %v147
    %vm171 = vcmask 1045504
    %v172 = vsel %vm171, %v169, %v152
    %v173 = vsel %vm171, %v170, %v153
    %vm174 = vcmask 1046528
    %v175 = vsel %vm174, %v172, 1.0
    %v176 = vsel %vm174, %v173, 1.0
    %v177 = vld [vmem:[%s1] sm:$0xff]
    %v178 = vld [vmem:[%s1 + $0x8] sm:$0xff]
    %v179 = vld [vmem:[%s1 + $0x10] sm:$0xff]
    %v180 = vld [vmem:[%s1 + $0x18] sm:$0xff]
    %v181 = vld [vmem:[%s1 + $0x20] sm:$0xff]
    %v182 = vld [vmem:[%s1 + $0x28] sm:$0xff]
    %v183 = vld [vmem:[%s1 + $0x30] sm:$0xff]
    %v184 = vld [vmem:[%s1 + $0x38] sm:$0xff]
    %vm185 = vcmask 64512
    %v187 = vsel %vm185, %v177, 0
    %v190 = vsel %vm185, %v178, 0
    %v193 = vsel %vm185, %v179, 0
    %v196 = vsel %vm185, %v180, 0
    %v199 = vsel %vm185, %v181, 0
    %v202 = vsel %vm185, %v182, 0
    %v205 = vsel %vm185, %v183, 0
    %v208 = vsel %vm185, %v184, 0
    %210 = vmatprep.subr.mxu0 0.0
    %211 = vmatpush1.msra.mxu0 0.0
    %212 = vmatprep.subr.mxu0 0.0
    %213 = vmatpush1.msra.mxu0 0.0
    %214 = vmatprep.subr.mxu0 0.0
    %215 = vmatpush1.msra.mxu0 0.0
    %216 = vmatprep.subr.mxu0 0.0
    %217 = vmatpush1.msra.mxu0 0.0
    %218 = vmatprep.subr.mxu0 0.0
    %219 = vmatpush1.msra.mxu0 0.0
    %220 = vmatprep.subr.mxu0 0.0
    %221 = vmatpush1.msra.mxu0 0.0
    %222 = vmatprep.subr.mxu0 0.0
    %223 = vmatpush1.msra.mxu0 0.0
    %224 = vmatprep.subr.mxu0 0.0
    %225 = vmatpush1.msra.mxu0 0.0
    %226 = vmatprep.subr.mxu0 0.0
    %227 = vmatpush1.msra.mxu0 0.0
    %228 = vmatprep.subr.mxu0 0.0
    %229 = vmatpush1.msra.mxu0 0.0
    %230 = vmatprep.subr.mxu0 0.0
    %231 = vmatpush1.msra.mxu0 0.0
    %232 = vmatprep.subr.mxu0 0.0
    %233 = vmatpush1.msra.mxu0 0.0
    %234 = vmatprep.subr.mxu0 0.0
    %235 = vmatpush1.msra.mxu0 0.0
    %236 = vmatprep.subr.mxu0 0.0
    %237 = vmatpush1.msra.mxu0 0.0
    %238 = vmatprep.subr.mxu0 0.0
    %239 = vmatpush1.msra.mxu0 0.0
    %240 = vmatprep.subr.mxu0 %v176
    %241 = vmatpush1.msra.mxu0 %v175
    %242 = vmatprep.subr.mxu0 0.0
    %243 = vmatpush2.msra.mxu0 0.0
    %244 = vmatprep.subr.mxu0 0.0
    %245 = vmatpush2.msra.mxu0 0.0
    %246 = vmatprep.subr.mxu0 0.0
    %247 = vmatpush2.msra.mxu0 0.0
    %248 = vmatprep.subr.mxu0 0.0
    %249 = vmatpush2.msra.mxu0 0.0
    %250 = vmatprep.subr.mxu0 0.0
    %251 = vmatpush2.msra.mxu0 0.0
    %252 = vmatprep.subr.mxu0 0.0
    %253 = vmatpush2.msra.mxu0 0.0
    %254 = vmatprep.subr.mxu0 0.0
    %255 = vmatpush2.msra.mxu0 0.0
    %256 = vmatprep.subr.mxu0 0.0
    %257 = vmatpush2.msra.mxu0 0.0
    %258 = vmatprep.subr.mxu0 0.0
    %259 = vmatpush2.msra.mxu0 0.0
    %260 = vmatprep.subr.mxu0 0.0
    %261 = vmatpush2.msra.mxu0 0.0
    %262 = vmatprep.subr.mxu0 0.0
    %263 = vmatpush2.msra.mxu0 0.0
    %264 = vmatprep.subr.mxu0 0.0
    %265 = vmatpush2.msra.mxu0 0.0
    %266 = vmatprep.subr.mxu0 0.0
    %267 = vmatpush2.msra.mxu0 0.0
    %268 = vmatprep.subr.mxu0 0.0
    %269 = vmatpush2.msra.mxu0 0.0
    %270 = vmatprep.subr.mxu0 0.0
    %271 = vmatpush2.msra.mxu0 0.0
    %272 = vmatprep.subr.mxu0 0.0
    %273 = vmatpush2.msra.mxu0 0.0
    %274 = vmatprep.mubr.f32.mxu0 0.0
    %275 = vmatmul.mubr.f32.gmra.mxu0 %v187
    %v276 = vpop.f32.mrf.mxu0
    %v277 = vadd.f32 0.0, %v276
    %v278 = vpop.f32.mrf.mxu0
    %v279 = vadd.f32 0.0, %v278
    %280 = vmatprep.mubr.f32.mxu0 0.0
    %281 = vmatmul.mubr.f32.gmra.mxu0 %v190
    %v282 = vpop.f32.mrf.mxu0
    %v283 = vadd.f32 0.0, %v282
    %v284 = vpop.f32.mrf.mxu0
    %v285 = vadd.f32 0.0, %v284
    %286 = vmatprep.mubr.f32.mxu0 0.0
    %287 = vmatmul.mubr.f32.gmra.mxu0 %v193
    %v288 = vpop.f32.mrf.mxu0
    %v289 = vadd.f32 0.0, %v288
    %v290 = vpop.f32.mrf.mxu0
    %v291 = vadd.f32 0.0, %v290
    %292 = vmatprep.mubr.f32.mxu0 0.0
    %293 = vmatmul.mubr.f32.gmra.mxu0 %v196
    %v294 = vpop.f32.mrf.mxu0
    %v295 = vadd.f32 0.0, %v294
    %v296 = vpop.f32.mrf.mxu0
    %v297 = vadd.f32 0.0, %v296
    %298 = vmatprep.mubr.f32.mxu0 0.0
    %299 = vmatmul.mubr.f32.gmra.mxu0 %v199
    %v300 = vpop.f32.mrf.mxu0
    %v301 = vadd.f32 0.0, %v300
    %v302 = vpop.f32.mrf.mxu0
    %v303 = vadd.f32 0.0, %v302
    %304 = vmatprep.mubr.f32.mxu0 0.0
    %305 = vmatmul.mubr.f32.gmra.mxu0 %v202
    %v306 = vpop.f32.mrf.mxu0
    %v307 = vadd.f32 0.0, %v306
    %v308 = vpop.f32.mrf.mxu0
    %v309 = vadd.f32 0.0, %v308
    %310 = vmatprep.mubr.f32.mxu0 0.0
    %311 = vmatmul.mubr.f32.gmra.mxu0 %v205
    %v312 = vpop.f32.mrf.mxu0
    %v313 = vadd.f32 0.0, %v312
    %v314 = vpop.f32.mrf.mxu0
    %v315 = vadd.f32 0.0, %v314
    %316 = vmatprep.mubr.f32.mxu0 0.0
    %317 = vmatmul.mubr.f32.gmra.mxu0 %v208
    %v318 = vpop.f32.mrf.mxu0
    %v319 = vadd.f32 0.0, %v318
    %v320 = vpop.f32.mrf.mxu0
    %v321 = vadd.f32 0.0, %v320
    %322 = vdwg.mxu0
    %v323 = vmul.f32 %v277, 0.2
    %v324 = vmul.f32 %v279, 0.2
    %v325 = vmul.f32 %v283, 0.2
    %v326 = vmul.f32 %v285, 0.2
    %v327 = vmul.f32 %v289, 0.2
    %v328 = vmul.f32 %v291, 0.2
    %v329 = vmul.f32 %v295, 0.2
    %v330 = vmul.f32 %v297, 0.2
    %v331 = vmul.f32 %v301, 0.2
    %v332 = vmul.f32 %v303, 0.2
    %v333 = vmul.f32 %v307, 0.2
    %v334 = vmul.f32 %v309, 0.2
    %v335 = vmul.f32 %v313, 0.2
    %v336 = vmul.f32 %v315, 0.2
    %v337 = vmul.f32 %v319, 0.2
    %v338 = vmul.f32 %v321, 0.2
    %v339 = vmax.f32 %v277, %v323
    %v340 = vmax.f32 %v279, %v324
    %v341 = vmax.f32 %v283, %v325
    %v342 = vmax.f32 %v285, %v326
    %v343 = vmax.f32 %v289, %v327
    %v344 = vmax.f32 %v291, %v328
    %v345 = vmax.f32 %v295, %v329
    %v346 = vmax.f32 %v297, %v330
    %v347 = vmax.f32 %v301, %v331
    %v348 = vmax.f32 %v303, %v332
    %v349 = vmax.f32 %v307, %v333
    %v350 = vmax.f32 %v309, %v334
    %v351 = vmax.f32 %v313, %v335
    %v352 = vmax.f32 %v315, %v336
    %v353 = vmax.f32 %v319, %v337
    %v354 = vmax.f32 %v321, %v338
    %355 = vrot.lane.b32.xlu0 %v339, 2
    %v356 = vpop.permute.xlu0 %355
    %357 = vrot.lane.b32.xlu0 %v341, 2
    %v358 = vpop.permute.xlu0 %357
    %359 = vrot.lane.b32.xlu0 %v343, 2
    %v360 = vpop.permute.xlu0 %359
    %361 = vrot.lane.b32.xlu0 %v345, 2
    %v362 = vpop.permute.xlu0 %361
    %363 = vrot.lane.b32.xlu0 %v347, 2
    %v364 = vpop.permute.xlu0 %363
    %365 = vrot.lane.b32.xlu0 %v349, 2
    %v366 = vpop.permute.xlu0 %365
    %367 = vrot.lane.b32.xlu0 %v351, 2
    %v368 = vpop.permute.xlu0 %367
    %369 = vrot.lane.b32.xlu0 %v353, 2
    %v370 = vpop.permute.xlu0 %369
    %371 = vrot.lane.b32.xlu0 %v340, 2
    %v372 = vpop.permute.xlu0 %371
    %373 = vrot.lane.b32.xlu0 %v342, 2
    %v374 = vpop.permute.xlu0 %373
    %375 = vrot.lane.b32.xlu0 %v344, 2
    %v376 = vpop.permute.xlu0 %375
    %377 = vrot.lane.b32.xlu0 %v346, 2
    %v378 = vpop.permute.xlu0 %377
    %379 = vrot.lane.b32.xlu0 %v348, 2
    %v380 = vpop.permute.xlu0 %379
    %381 = vrot.lane.b32.xlu0 %v350, 2
    %v382 = vpop.permute.xlu0 %381
    %383 = vrot.lane.b32.xlu0 %v352, 2
    %v384 = vpop.permute.xlu0 %383
    %385 = vrot.lane.b32.xlu0 %v354, 2
    %v386 = vpop.permute.xlu0 %385
    %v387 = vsel %vm85, %v356, %v372
    %v388 = vsel %vm85, %v358, %v374
    %v389 = vsel %vm85, %v360, %v376
    %v390 = vsel %vm85, %v362, %v378
    %v391 = vsel %vm85, %v364, %v380
    %v392 = vsel %vm85, %v366, %v382
    %v393 = vsel %vm85, %v368, %v384
    %v394 = vsel %vm85, %v370, %v386
    %v395 = vsel %vm85, %v372, %v356
    %v396 = vsel %vm85, %v374, %v358
    %v397 = vsel %vm85, %v376, %v360
    %v398 = vsel %vm85, %v378, %v362
    %v399 = vsel %vm85, %v380, %v364
    %v400 = vsel %vm85, %v382, %v366
    %v401 = vsel %vm85, %v384, %v368
    %v402 = vsel %vm85, %v386, %v370
    %v403 = vsel %vm55, 1, 0
    %v404 = vsel %vm56, 1, 0
    %vm405 = vcmp.eq.s32.totalorder %v403, 1
    %vm406 = vcmp.eq.s32.totalorder %v404, 1
    %v407 = vsel %vm405, %v395, 0.0
    %v408 = vsel %vm406, %v387, 0.0
    %v409 = vsel %vm405, %v396, 0.0
    %v410 = vsel %vm406, %v388, 0.0
    %v411 = vsel %vm405, %v397, 0.0
    %v412 = vsel %vm406, %v389, 0.0
    %v413 = vsel %vm405, %v398, 0.0
    %v414 = vsel %vm406, %v390, 0.0
    %v415 = vsel %vm405, %v399, 0.0
    %v416 = vsel %vm406, %v391, 0.0
    %v417 = vsel %vm405, %v400, 0.0
    %v418 = vsel %vm406, %v392, 0.0
    %v419 = vsel %vm405, %v401, 0.0
    %v420 = vsel %vm406, %v393, 0.0
    %v421 = vsel %vm405, %v402, 0.0
    %v422 = vsel %vm406, %v394, 0.0
    %423 = vrot.lane.b32.xlu0 %v339, 1
    %v424 = vpop.permute.xlu0 %423
    %425 = vrot.lane.b32.xlu0 %v341, 1
    %v426 = vpop.permute.xlu0 %425
    %427 = vrot.lane.b32.xlu0 %v343, 1
    %v428 = vpop.permute.xlu0 %427
    %429 = vrot.lane.b32.xlu0 %v345, 1
    %v430 = vpop.permute.xlu0 %429
    %431 = vrot.lane.b32.xlu0 %v347, 1
    %v432 = vpop.permute.xlu0 %431
    %433 = vrot.lane.b32.xlu0 %v349, 1
    %v434 = vpop.permute.xlu0 %433
    %435 = vrot.lane.b32.xlu0 %v351, 1
    %v436 = vpop.permute.xlu0 %435
    %437 = vrot.lane.b32.xlu0 %v353, 1
    %v438 = vpop.permute.xlu0 %437
    %439 = vrot.lane.b32.xlu0 %v340, 1
    %v440 = vpop.permute.xlu0 %439
    %441 = vrot.lane.b32.xlu0 %v342, 1
    %v442 = vpop.permute.xlu0 %441
    %443 = vrot.lane.b32.xlu0 %v344, 1
    %v444 = vpop.permute.xlu0 %443
    %445 = vrot.lane.b32.xlu0 %v346, 1
    %v446 = vpop.permute.xlu0 %445
    %447 = vrot.lane.b32.xlu0 %v348, 1
    %v448 = vpop.permute.xlu0 %447
    %449 = vrot.lane.b32.xlu0 %v350, 1
    %v450 = vpop.permute.xlu0 %449
    %451 = vrot.lane.b32.xlu0 %v352, 1
    %v452 = vpop.permute.xlu0 %451
    %453 = vrot.lane.b32.xlu0 %v354, 1
    %v454 = vpop.permute.xlu0 %453
    %v455 = vsel %vm94, %v424, %v440
    %v456 = vsel %vm94, %v426, %v442
    %v457 = vsel %vm94, %v428, %v444
    %v458 = vsel %vm94, %v430, %v446
    %v459 = vsel %vm94, %v432, %v448
    %v460 = vsel %vm94, %v434, %v450
    %v461 = vsel %vm94, %v436, %v452
    %v462 = vsel %vm94, %v438, %v454
    %v463 = vsel %vm94, %v440, %v424
    %v464 = vsel %vm94, %v442, %v426
    %v465 = vsel %vm94, %v444, %v428
    %v466 = vsel %vm94, %v446, %v430
    %v467 = vsel %vm94, %v448, %v432
    %v468 = vsel %vm94, %v450, %v434
    %v469 = vsel %vm94, %v452, %v436
    %v470 = vsel %vm94, %v454, %v438
    %v471 = vsel %vm51, 1, 0
    %v472 = vsel %vm52, 1, 0
    %vm473 = vcmp.eq.s32.totalorder %v471, 1
    %vm474 = vcmp.eq.s32.totalorder %v472, 1
    %v475 = vsel %vm473, %v463, 0.0
    %v476 = vsel %vm474, %v455, 0.0
    %v477 = vsel %vm473, %v464, 0.0
    %v478 = vsel %vm474, %v456, 0.0
    %v479 = vsel %vm473, %v465, 0.0
    %v480 = vsel %vm474, %v457, 0.0
    %v481 = vsel %vm473, %v466, 0.0
    %v482 = vsel %vm474, %v458, 0.0
    %v483 = vsel %vm473, %v467, 0.0
    %v484 = vsel %vm474, %v459, 0.0
    %v485 = vsel %vm473, %v468, 0.0
    %v486 = vsel %vm474, %v460, 0.0
    %v487 = vsel %vm473, %v469, 0.0
    %v488 = vsel %vm474, %v461, 0.0
    %v489 = vsel %vm473, %v470, 0.0
    %v490 = vsel %vm474, %v462, 0.0
    %491 = vrot.lane.b32.xlu0 %v339, 127
    %v492 = vpop.permute.xlu0 %491
    %493 = vrot.lane.b32.xlu0 %v341, 127
    %v494 = vpop.permute.xlu0 %493
    %495 = vrot.lane.b32.xlu0 %v343, 127
    %v496 = vpop.permute.xlu0 %495
    %497 = vrot.lane.b32.xlu0 %v345, 127
    %v498 = vpop.permute.xlu0 %497
    %499 = vrot.lane.b32.xlu0 %v347, 127
    %v500 = vpop.permute.xlu0 %499
    %501 = vrot.lane.b32.xlu0 %v349, 127
    %v502 = vpop.permute.xlu0 %501
    %503 = vrot.lane.b32.xlu0 %v351, 127
    %v504 = vpop.permute.xlu0 %503
    %505 = vrot.lane.b32.xlu0 %v353, 127
    %v506 = vpop.permute.xlu0 %505
    %507 = vrot.lane.b32.xlu0 %v340, 127
    %v508 = vpop.permute.xlu0 %507
    %509 = vrot.lane.b32.xlu0 %v342, 127
    %v510 = vpop.permute.xlu0 %509
    %511 = vrot.lane.b32.xlu0 %v344, 127
    %v512 = vpop.permute.xlu0 %511
    %513 = vrot.lane.b32.xlu0 %v346, 127
    %v514 = vpop.permute.xlu0 %513
    %515 = vrot.lane.b32.xlu0 %v348, 127
    %v516 = vpop.permute.xlu0 %515
    %517 = vrot.lane.b32.xlu0 %v350, 127
    %v518 = vpop.permute.xlu0 %517
    %519 = vrot.lane.b32.xlu0 %v352, 127
    %v520 = vpop.permute.xlu0 %519
    %521 = vrot.lane.b32.xlu0 %v354, 127
    %v522 = vpop.permute.xlu0 %521
    %v523 = vsel %vm103, %v492, %v508
    %v524 = vsel %vm103, %v494, %v510
    %v525 = vsel %vm103, %v496, %v512
    %v526 = vsel %vm103, %v498, %v514
    %v527 = vsel %vm103, %v500, %v516
    %v528 = vsel %vm103, %v502, %v518
    %v529 = vsel %vm103, %v504, %v520
    %v530 = vsel %vm103, %v506, %v522
    %v531 = vsel %vm103, %v508, %v492
    %v532 = vsel %vm103, %v510, %v494
    %v533 = vsel %vm103, %v512, %v496
    %v534 = vsel %vm103, %v514, %v498
    %v535 = vsel %vm103, %v516, %v500
    %v536 = vsel %vm103, %v518, %v502
    %v537 = vsel %vm103, %v520, %v504
    %v538 = vsel %vm103, %v522, %v506
    %v539 = vsel %vm49, 1, 0
    %v540 = vsel %vm50, 1, 0
    %vm541 = vcmp.eq.s32.totalorder %v539, 1
    %vm542 = vcmp.eq.s32.totalorder %v540, 1
    %v543 = vsel %vm541, %v523, 0.0
    %v544 = vsel %vm542, %v531, 0.0
    %v545 = vsel %vm541, %v524, 0.0
    %v546 = vsel %vm542, %v532, 0.0
    %v547 = vsel %vm541, %v525, 0.0
    %v548 = vsel %vm542, %v533, 0.0
    %v549 = vsel %vm541, %v526, 0.0
    %v550 = vsel %vm542, %v534, 0.0
    %v551 = vsel %vm541, %v527, 0.0
    %v552 = vsel %vm542, %v535, 0.0
    %v553 = vsel %vm541, %v528, 0.0
    %v554 = vsel %vm542, %v536, 0.0
    %v555 = vsel %vm541, %v529, 0.0
    %v556 = vsel %vm542, %v537, 0.0
    %v557 = vsel %vm541, %v530, 0.0
    %v558 = vsel %vm542, %v538, 0.0
    %559 = vrot.lane.b32.xlu0 %v339, 126
    %v560 = vpop.permute.xlu0 %559
    %561 = vrot.lane.b32.xlu0 %v341, 126
    %v562 = vpop.permute.xlu0 %561
    %563 = vrot.lane.b32.xlu0 %v343, 126
    %v564 = vpop.permute.xlu0 %563
    %565 = vrot.lane.b32.xlu0 %v345, 126
    %v566 = vpop.permute.xlu0 %565
    %567 = vrot.lane.b32.xlu0 %v347, 126
    %v568 = vpop.permute.xlu0 %567
    %569 = vrot.lane.b32.xlu0 %v349, 126
    %v570 = vpop.permute.xlu0 %569
    %571 = vrot.lane.b32.xlu0 %v351, 126
    %v572 = vpop.permute.xlu0 %571
    %573 = vrot.lane.b32.xlu0 %v353, 126
    %v574 = vpop.permute.xlu0 %573
    %575 = vrot.lane.b32.xlu0 %v340, 126
    %v576 = vpop.permute.xlu0 %575
    %577 = vrot.lane.b32.xlu0 %v342, 126
    %v578 = vpop.permute.xlu0 %577
    %579 = vrot.lane.b32.xlu0 %v344, 126
    %v580 = vpop.permute.xlu0 %579
    %581 = vrot.lane.b32.xlu0 %v346, 126
    %v582 = vpop.permute.xlu0 %581
    %583 = vrot.lane.b32.xlu0 %v348, 126
    %v584 = vpop.permute.xlu0 %583
    %585 = vrot.lane.b32.xlu0 %v350, 126
    %v586 = vpop.permute.xlu0 %585
    %587 = vrot.lane.b32.xlu0 %v352, 126
    %v588 = vpop.permute.xlu0 %587
    %589 = vrot.lane.b32.xlu0 %v354, 126
    %v590 = vpop.permute.xlu0 %589
    %v591 = vsel %vm112, %v560, %v576
    %v592 = vsel %vm112, %v562, %v578
    %v593 = vsel %vm112, %v564, %v580
    %v594 = vsel %vm112, %v566, %v582
    %v595 = vsel %vm112, %v568, %v584
    %v596 = vsel %vm112, %v570, %v586
    %v597 = vsel %vm112, %v572, %v588
    %v598 = vsel %vm112, %v574, %v590
    %v599 = vsel %vm112, %v576, %v560
    %v600 = vsel %vm112, %v578, %v562
    %v601 = vsel %vm112, %v580, %v564
    %v602 = vsel %vm112, %v582, %v566
    %v603 = vsel %vm112, %v584, %v568
    %v604 = vsel %vm112, %v586, %v570
    %v605 = vsel %vm112, %v588, %v572
    %v606 = vsel %vm112, %v590, %v574
    %v607 = vsel %vm53, 1, 0
    %v608 = vsel %vm54, 1, 0
    %vm609 = vcmp.eq.s32.totalorder %v607, 1
    %vm610 = vcmp.eq.s32.totalorder %v608, 1
    %v611 = vsel %vm609, %v591, 0.0
    %v612 = vsel %vm610, %v599, 0.0
    %v613 = vsel %vm609, %v592, 0.0
    %v614 = vsel %vm610, %v600, 0.0
    %v615 = vsel %vm609, %v593, 0.0
    %v616 = vsel %vm610, %v601, 0.0
    %v617 = vsel %vm609, %v594, 0.0
    %v618 = vsel %vm610, %v602, 0.0
    %v619 = vsel %vm609, %v595, 0.0
    %v620 = vsel %vm610, %v603, 0.0
    %v621 = vsel %vm609, %v596, 0.0
    %v622 = vsel %vm610, %v604, 0.0
    %v623 = vsel %vm609, %v597, 0.0
    %v624 = vsel %vm610, %v605, 0.0
    %v625 = vsel %vm609, %v598, 0.0
    %v626 = vsel %vm610, %v606, 0.0
    %v627 = vsel %vm156, 1.0, 0.0
    %v628 = vld [vmem:[%s2] sm:$0xff]
    %v629 = vld [vmem:[%s2 + $0x8] sm:$0xff]
    %v630 = vld [vmem:[%s2 + $0x10] sm:$0xff]
    %v631 = vld [vmem:[%s2 + $0x18] sm:$0xff]
    %v632 = vld [vmem:[%s2 + $0x20] sm:$0xff]
    %v633 = vld [vmem:[%s2 + $0x28] sm:$0xff]
    %v634 = vld [vmem:[%s2 + $0x30] sm:$0xff]
    %v635 = vld [vmem:[%s2 + $0x38] sm:$0xff]
    %v636 = vld [vmem:[%s2 + $0x40] sm:$0xff]
    %v637 = vld [vmem:[%s2 + $0x48] sm:$0xff]
    %v638 = vld [vmem:[%s2 + $0x50] sm:$0xff]
    %v639 = vld [vmem:[%s2 + $0x58] sm:$0xff]
    %v640 = vld [vmem:[%s2 + $0x60] sm:$0xff]
    %v641 = vld [vmem:[%s2 + $0x68] sm:$0xff]
    %v642 = vld [vmem:[%s2 + $0x70] sm:$0xff]
    %v643 = vld [vmem:[%s2 + $0x78] sm:$0xff]
    %v644 = vld [vmem:[%s2 + $0x80] sm:$0xff]
    %v645 = vld [vmem:[%s2 + $0x88] sm:$0xff]
    %v646 = vld [vmem:[%s2 + $0x90] sm:$0xff]
    %v647 = vld [vmem:[%s2 + $0x98] sm:$0xff]
    %v648 = vld [vmem:[%s2 + $0xa0] sm:$0xff]
    %v649 = vld [vmem:[%s2 + $0xa8] sm:$0xff]
    %v650 = vld [vmem:[%s2 + $0xb0] sm:$0xff]
    %v651 = vld [vmem:[%s2 + $0xb8] sm:$0xff]
    %v652 = vld [vmem:[%s2 + $0xc0] sm:$0xff]
    %v653 = vld [vmem:[%s2 + $0xc8] sm:$0xff]
    %v654 = vld [vmem:[%s2 + $0xd0] sm:$0xff]
    %v655 = vld [vmem:[%s2 + $0xd8] sm:$0xff]
    %v656 = vld [vmem:[%s2 + $0xe0] sm:$0xff]
    %v657 = vld [vmem:[%s2 + $0xe8] sm:$0xff]
    %v658 = vld [vmem:[%s2 + $0xf0] sm:$0xff]
    %v659 = vld [vmem:[%s2 + $0xf8] sm:$0xff]
    %v660 = vld [vmem:[%s2 + $0x100] sm:$0xff]
    %v661 = vld [vmem:[%s2 + $0x108] sm:$0xff]
    %v662 = vld [vmem:[%s2 + $0x110] sm:$0xff]
    %v663 = vld [vmem:[%s2 + $0x118] sm:$0xff]
    %v664 = vld [vmem:[%s2 + $0x120] sm:$0xff]
    %v665 = vld [vmem:[%s2 + $0x128] sm:$0xff]
    %v666 = vld [vmem:[%s2 + $0x130] sm:$0xff]
    %v667 = vld [vmem:[%s2 + $0x138] sm:$0xff]
    %v668 = vld [vmem:[%s2 + $0x140] sm:$0xff]
    %v669 = vld [vmem:[%s2 + $0x148] sm:$0xff]
    %v670 = vld [vmem:[%s2 + $0x150] sm:$0xff]
    %v671 = vld [vmem:[%s2 + $0x158] sm:$0xff]
    %v672 = vld [vmem:[%s2 + $0x160] sm:$0xff]
    %v673 = vld [vmem:[%s2 + $0x168] sm:$0xff]
    %v674 = vld [vmem:[%s2 + $0x170] sm:$0xff]
    %v675 = vld [vmem:[%s2 + $0x178] sm:$0xff]
    %vm676 = vcmask 588800
    %v678 = vsel %vm676, %v630, 0
    %v681 = vsel %vm676, %v633, 0
    %v684 = vsel %vm676, %v636, 0
    %v687 = vsel %vm676, %v639, 0
    %v690 = vsel %vm676, %v642, 0
    %v693 = vsel %vm676, %v645, 0
    %v696 = vsel %vm676, %v648, 0
    %v699 = vsel %vm676, %v651, 0
    %v702 = vsel %vm676, %v654, 0
    %v705 = vsel %vm676, %v657, 0
    %v708 = vsel %vm676, %v660, 0
    %v711 = vsel %vm676, %v663, 0
    %v714 = vsel %vm676, %v666, 0
    %v717 = vsel %vm676, %v669, 0
    %v720 = vsel %vm676, %v672, 0
    %v723 = vsel %vm676, %v675, 0
    %725 = vmatprep.subr.mxu0 %v490
    %726 = vmatpush1.msra.mxu0 %v489
    %727 = vmatprep.subr.mxu0 %v488
    %728 = vmatpush1.msra.mxu0 %v487
    %729 = vmatprep.subr.mxu0 %v486
    %730 = vmatpush1.msra.mxu0 %v485
    %731 = vmatprep.subr.mxu0 %v484
    %732 = vmatpush1.msra.mxu0 %v483
    %733 = vmatprep.subr.mxu0 %v482
    %734 = vmatpush1.msra.mxu0 %v481
    %735 = vmatprep.subr.mxu0 %v480
    %736 = vmatpush1.msra.mxu0 %v479
    %737 = vmatprep.subr.mxu0 %v478
    %738 = vmatpush1.msra.mxu0 %v477
    %739 = vmatprep.subr.mxu0 %v476
    %740 = vmatpush1.msra.mxu0 %v475
    %741 = vmatprep.subr.mxu0 %v422
    %742 = vmatpush1.msra.mxu0 %v421
    %743 = vmatprep.subr.mxu0 %v420
    %744 = vmatpush1.msra.mxu0 %v419
    %745 = vmatprep.subr.mxu0 %v418
    %746 = vmatpush1.msra.mxu0 %v417
    %747 = vmatprep.subr.mxu0 %v416
    %748 = vmatpush1.msra.mxu0 %v415
    %749 = vmatprep.subr.mxu0 %v414
    %750 = vmatpush1.msra.mxu0 %v413
    %751 = vmatprep.subr.mxu0 %v412
    %752 = vmatpush1.msra.mxu0 %v411
    %753 = vmatprep.subr.mxu0 %v410
    %754 = vmatpush1.msra.mxu0 %v409
    %755 = vmatprep.subr.mxu0 %v408
    %756 = vmatpush1.msra.mxu0 %v407
    %757 = vmatprep.subr.mxu0 %v558
    %758 = vmatpush2.msra.mxu0 %v557
    %759 = vmatprep.subr.mxu0 %v556
    %760 = vmatpush2.msra.mxu0 %v555
    %761 = vmatprep.subr.mxu0 %v554
    %762 = vmatpush2.msra.mxu0 %v553
    %763 = vmatprep.subr.mxu0 %v552
    %764 = vmatpush2.msra.mxu0 %v551
    %765 = vmatprep.subr.mxu0 %v550
    %766 = vmatpush2.msra.mxu0 %v549
    %767 = vmatprep.subr.mxu0 %v548
    %768 = vmatpush2.msra.mxu0 %v547
    %769 = vmatprep.subr.mxu0 %v546
    %770 = vmatpush2.msra.mxu0 %v545
    %771 = vmatprep.subr.mxu0 %v544
    %772 = vmatpush2.msra.mxu0 %v543
    %773 = vmatprep.subr.mxu0 %v354
    %774 = vmatpush2.msra.mxu0 %v353
    %775 = vmatprep.subr.mxu0 %v352
    %776 = vmatpush2.msra.mxu0 %v351
    %777 = vmatprep.subr.mxu0 %v350
    %778 = vmatpush2.msra.mxu0 %v349
    %779 = vmatprep.subr.mxu0 %v348
    %780 = vmatpush2.msra.mxu0 %v347
    %781 = vmatprep.subr.mxu0 %v346
    %782 = vmatpush2.msra.mxu0 %v345
    %783 = vmatprep.subr.mxu0 %v344
    %784 = vmatpush2.msra.mxu0 %v343
    %785 = vmatprep.subr.mxu0 %v342
    %786 = vmatpush2.msra.mxu0 %v341
    %787 = vmatprep.subr.mxu0 %v340
    %788 = vmatpush2.msra.mxu0 %v339
    %789 = vmatprep.mubr.f32.mxu0 %v629
    %790 = vmatmul.mubr.f32.gmra.mxu0 %v628
    %v791 = vpop.f32.mrf.mxu0
    %v792 = vadd.f32 0.0, %v791
    %v793 = vpop.f32.mrf.mxu0
    %v794 = vadd.f32 0.0, %v793
    %795 = vmatprep.mubr.f32.mxu0 %v632
    %796 = vmatmul.mubr.f32.gmra.mxu0 %v631
    %v797 = vpop.f32.mrf.mxu0
    %v798 = vadd.f32 0.0, %v797
    %v799 = vpop.f32.mrf.mxu0
    %v800 = vadd.f32 0.0, %v799
    %801 = vmatprep.mubr.f32.mxu0 %v635
    %802 = vmatmul.mubr.f32.gmra.mxu0 %v634
    %v803 = vpop.f32.mrf.mxu0
    %v804 = vadd.f32 0.0, %v803
    %v805 = vpop.f32.mrf.mxu0
    %v806 = vadd.f32 0.0, %v805
    %807 = vmatprep.mubr.f32.mxu0 %v638
    %808 = vmatmul.mubr.f32.gmra.mxu0 %v637
    %v809 = vpop.f32.mrf.mxu0
    %v810 = vadd.f32 0.0, %v809
    %v811 = vpop.f32.mrf.mxu0
    %v812 = vadd.f32 0.0, %v811
    %813 = vmatprep.mubr.f32.mxu0 %v641
    %814 = vmatmul.mubr.f32.gmra.mxu0 %v640
    %v815 = vpop.f32.mrf.mxu0
    %v816 = vadd.f32 0.0, %v815
    %v817 = vpop.f32.mrf.mxu0
    %v818 = vadd.f32 0.0, %v817
    %819 = vmatprep.mubr.f32.mxu0 %v644
    %820 = vmatmul.mubr.f32.gmra.mxu0 %v643
    %v821 = vpop.f32.mrf.mxu0
    %v822 = vadd.f32 0.0, %v821
    %v823 = vpop.f32.mrf.mxu0
    %v824 = vadd.f32 0.0, %v823
    %825 = vmatprep.mubr.f32.mxu0 %v647
    %826 = vmatmul.mubr.f32.gmra.mxu0 %v646
    %v827 = vpop.f32.mrf.mxu0
    %v828 = vadd.f32 0.0, %v827
    %v829 = vpop.f32.mrf.mxu0
    %v830 = vadd.f32 0.0, %v829
    %831 = vmatprep.mubr.f32.mxu0 %v650
    %832 = vmatmul.mubr.f32.gmra.mxu0 %v649
    %v833 = vpop.f32.mrf.mxu0
    %v834 = vadd.f32 0.0, %v833
    %v835 = vpop.f32.mrf.mxu0
    %v836 = vadd.f32 0.0, %v835
    %837 = vmatprep.mubr.f32.mxu0 %v653
    %838 = vmatmul.mubr.f32.gmra.mxu0 %v652
    %v839 = vpop.f32.mrf.mxu0
    %v840 = vadd.f32 0.0, %v839
    %v841 = vpop.f32.mrf.mxu0
    %v842 = vadd.f32 0.0, %v841
    %843 = vmatprep.mubr.f32.mxu0 %v656
    %844 = vmatmul.mubr.f32.gmra.mxu0 %v655
    %v845 = vpop.f32.mrf.mxu0
    %v846 = vadd.f32 0.0, %v845
    %v847 = vpop.f32.mrf.mxu0
    %v848 = vadd.f32 0.0, %v847
    %849 = vmatprep.mubr.f32.mxu0 %v659
    %850 = vmatmul.mubr.f32.gmra.mxu0 %v658
    %v851 = vpop.f32.mrf.mxu0
    %v852 = vadd.f32 0.0, %v851
    %v853 = vpop.f32.mrf.mxu0
    %v854 = vadd.f32 0.0, %v853
    %855 = vmatprep.mubr.f32.mxu0 %v662
    %856 = vmatmul.mubr.f32.gmra.mxu0 %v661
    %v857 = vpop.f32.mrf.mxu0
    %v858 = vadd.f32 0.0, %v857
    %v859 = vpop.f32.mrf.mxu0
    %v860 = vadd.f32 0.0, %v859
    %861 = vmatprep.mubr.f32.mxu0 %v665
    %862 = vmatmul.mubr.f32.gmra.mxu0 %v664
    %v863 = vpop.f32.mrf.mxu0
    %v864 = vadd.f32 0.0, %v863
    %v865 = vpop.f32.mrf.mxu0
    %v866 = vadd.f32 0.0, %v865
    %867 = vmatprep.mubr.f32.mxu0 %v668
    %868 = vmatmul.mubr.f32.gmra.mxu0 %v667
    %v869 = vpop.f32.mrf.mxu0
    %v870 = vadd.f32 0.0, %v869
    %v871 = vpop.f32.mrf.mxu0
    %v872 = vadd.f32 0.0, %v871
    %873 = vmatprep.mubr.f32.mxu0 %v671
    %874 = vmatmul.mubr.f32.gmra.mxu0 %v670
    %v875 = vpop.f32.mrf.mxu0
    %v876 = vadd.f32 0.0, %v875
    %v877 = vpop.f32.mrf.mxu0
    %v878 = vadd.f32 0.0, %v877
    %879 = vmatprep.mubr.f32.mxu0 %v674
    %880 = vmatmul.mubr.f32.gmra.mxu0 %v673
    %v881 = vpop.f32.mrf.mxu0
    %v882 = vadd.f32 0.0, %v881
    %v883 = vpop.f32.mrf.mxu0
    %v884 = vadd.f32 0.0, %v883
    %885 = vdwg.mxu0
    %886 = vmatprep.subr.mxu0 0.0
    %887 = vmatpush1.msra.mxu0 0.0
    %888 = vmatprep.subr.mxu0 0.0
    %889 = vmatpush1.msra.mxu0 0.0
    %890 = vmatprep.subr.mxu0 0.0
    %891 = vmatpush1.msra.mxu0 0.0
    %892 = vmatprep.subr.mxu0 0.0
    %893 = vmatpush1.msra.mxu0 0.0
    %894 = vmatprep.subr.mxu0 0.0
    %895 = vmatpush1.msra.mxu0 0.0
    %896 = vmatprep.subr.mxu0 0.0
    %897 = vmatpush1.msra.mxu0 0.0
    %898 = vmatprep.subr.mxu0 0.0
    %899 = vmatpush1.msra.mxu0 0.0
    %900 = vmatprep.subr.mxu0 %v627
    %901 = vmatpush1.msra.mxu0 %v627
    %902 = vmatprep.subr.mxu0 %v626
    %903 = vmatpush1.msra.mxu0 %v625
    %904 = vmatprep.subr.mxu0 %v624
    %905 = vmatpush1.msra.mxu0 %v623
    %906 = vmatprep.subr.mxu0 %v622
    %907 = vmatpush1.msra.mxu0 %v621
    %908 = vmatprep.subr.mxu0 %v620
    %909 = vmatpush1.msra.mxu0 %v619
    %910 = vmatprep.subr.mxu0 %v618
    %911 = vmatpush1.msra.mxu0 %v617
    %912 = vmatprep.subr.mxu0 %v616
    %913 = vmatpush1.msra.mxu0 %v615
    %914 = vmatprep.subr.mxu0 %v614
    %915 = vmatpush1.msra.mxu0 %v613
    %916 = vmatprep.subr.mxu0 %v612
    %917 = vmatpush1.msra.mxu0 %v611
    %918 = vmatprep.subr.mxu0 0.0
    %919 = vmatpush2.msra.mxu0 0.0
    %920 = vmatprep.subr.mxu0 0.0
    %921 = vmatpush2.msra.mxu0 0.0
    %922 = vmatprep.subr.mxu0 0.0
    %923 = vmatpush2.msra.mxu0 0.0
    %924 = vmatprep.subr.mxu0 0.0
    %925 = vmatpush2.msra.mxu0 0.0
    %926 = vmatprep.subr.mxu0 0.0
    %927 = vmatpush2.msra.mxu0 0.0
    %928 = vmatprep.subr.mxu0 0.0
    %929 = vmatpush2.msra.mxu0 0.0
    %930 = vmatprep.subr.mxu0 0.0
    %931 = vmatpush2.msra.mxu0 0.0
    %932 = vmatprep.subr.mxu0 0.0
    %933 = vmatpush2.msra.mxu0 0.0
    %934 = vmatprep.subr.mxu0 0.0
    %935 = vmatpush2.msra.mxu0 0.0
    %936 = vmatprep.subr.mxu0 0.0
    %937 = vmatpush2.msra.mxu0 0.0
    %938 = vmatprep.subr.mxu0 0.0
    %939 = vmatpush2.msra.mxu0 0.0
    %940 = vmatprep.subr.mxu0 0.0
    %941 = vmatpush2.msra.mxu0 0.0
    %942 = vmatprep.subr.mxu0 0.0
    %943 = vmatpush2.msra.mxu0 0.0
    %944 = vmatprep.subr.mxu0 0.0
    %945 = vmatpush2.msra.mxu0 0.0
    %946 = vmatprep.subr.mxu0 0.0
    %947 = vmatpush2.msra.mxu0 0.0
    %948 = vmatprep.subr.mxu0 0.0
    %949 = vmatpush2.msra.mxu0 0.0
    %950 = vmatprep.mubr.f32.mxu0 0.0
    %951 = vmatmul.mubr.f32.gmra.mxu0 %v678
    %v952 = vpop.f32.mrf.mxu0
    %v953 = vadd.f32 %v792, %v952
    %v954 = vpop.f32.mrf.mxu0
    %v955 = vadd.f32 %v794, %v954
    %956 = vmatprep.mubr.f32.mxu0 0.0
    %957 = vmatmul.mubr.f32.gmra.mxu0 %v681
    %v958 = vpop.f32.mrf.mxu0
    %v959 = vadd.f32 %v798, %v958
    %v960 = vpop.f32.mrf.mxu0
    %v961 = vadd.f32 %v800, %v960
    %962 = vmatprep.mubr.f32.mxu0 0.0
    %963 = vmatmul.mubr.f32.gmra.mxu0 %v684
    %v964 = vpop.f32.mrf.mxu0
    %v965 = vadd.f32 %v804, %v964
    %v966 = vpop.f32.mrf.mxu0
    %v967 = vadd.f32 %v806, %v966
    %968 = vmatprep.mubr.f32.mxu0 0.0
    %969 = vmatmul.mubr.f32.gmra.mxu0 %v687
    %v970 = vpop.f32.mrf.mxu0
    %v971 = vadd.f32 %v810, %v970
    %v972 = vpop.f32.mrf.mxu0
    %v973 = vadd.f32 %v812, %v972
    %974 = vmatprep.mubr.f32.mxu0 0.0
    %975 = vmatmul.mubr.f32.gmra.mxu0 %v690
    %v976 = vpop.f32.mrf.mxu0
    %v977 = vadd.f32 %v816, %v976
    %v978 = vpop.f32.mrf.mxu0
    %v979 = vadd.f32 %v818, %v978
    %980 = vmatprep.mubr.f32.mxu0 0.0
    %981 = vmatmul.mubr.f32.gmra.mxu0 %v693
    %v982 = vpop.f32.mrf.mxu0
    %v983 = vadd.f32 %v822, %v982
    %v984 = vpop.f32.mrf.mxu0
    %v985 = vadd.f32 %v824, %v984
    %986 = vmatprep.mubr.f32.mxu0 0.0
    %987 = vmatmul.mubr.f32.gmra.mxu0 %v696
    %v988 = vpop.f32.mrf.mxu0
    %v989 = vadd.f32 %v828, %v988
    %v990 = vpop.f32.mrf.mxu0
    %v991 = vadd.f32 %v830, %v990
    %992 = vmatprep.mubr.f32.mxu0 0.0
    %993 = vmatmul.mubr.f32.gmra.mxu0 %v699
    %v994 = vpop.f32.mrf.mxu0
    %v995 = vadd.f32 %v834, %v994
    %v996 = vpop.f32.mrf.mxu0
    %v997 = vadd.f32 %v836, %v996
    %998 = vmatprep.mubr.f32.mxu0 0.0
    %999 = vmatmul.mubr.f32.gmra.mxu0 %v702
    %v1000 = vpop.f32.mrf.mxu0
    %v1001 = vadd.f32 %v840, %v1000
    %v1002 = vpop.f32.mrf.mxu0
    %v1003 = vadd.f32 %v842, %v1002
    %1004 = vmatprep.mubr.f32.mxu0 0.0
    %1005 = vmatmul.mubr.f32.gmra.mxu0 %v705
    %v1006 = vpop.f32.mrf.mxu0
    %v1007 = vadd.f32 %v846, %v1006
    %v1008 = vpop.f32.mrf.mxu0
    %v1009 = vadd.f32 %v848, %v1008
    %1010 = vmatprep.mubr.f32.mxu0 0.0
    %1011 = vmatmul.mubr.f32.gmra.mxu0 %v708
    %v1012 = vpop.f32.mrf.mxu0
    %v1013 = vadd.f32 %v852, %v1012
    %v1014 = vpop.f32.mrf.mxu0
    %v1015 = vadd.f32 %v854, %v1014
    %1016 = vmatprep.mubr.f32.mxu0 0.0
    %1017 = vmatmul.mubr.f32.gmra.mxu0 %v711
    %v1018 = vpop.f32.mrf.mxu0
    %v1019 = vadd.f32 %v858, %v1018
    %v1020 = vpop.f32.mrf.mxu0
    %v1021 = vadd.f32 %v860, %v1020
    %1022 = vmatprep.mubr.f32.mxu0 0.0
    %1023 = vmatmul.mubr.f32.gmra.mxu0 %v714
    %v1024 = vpop.f32.mrf.mxu0
    %v1025 = vadd.f32 %v864, %v1024
    %v1026 = vpop.f32.mrf.mxu0
    %v1027 = vadd.f32 %v866, %v1026
    %1028 = vmatprep.mubr.f32.mxu0 0.0
    %1029 = vmatmul.mubr.f32.gmra.mxu0 %v717
    %v1030 = vpop.f32.mrf.mxu0
    %v1031 = vadd.f32 %v870, %v1030
    %v1032 = vpop.f32.mrf.mxu0
    %v1033 = vadd.f32 %v872, %v1032
    %1034 = vmatprep.mubr.f32.mxu0 0.0
    %1035 = vmatmul.mubr.f32.gmra.mxu0 %v720
    %v1036 = vpop.f32.mrf.mxu0
    %v1037 = vadd.f32 %v876, %v1036
    %v1038 = vpop.f32.mrf.mxu0
    %v1039 = vadd.f32 %v878, %v1038
    %1040 = vmatprep.mubr.f32.mxu0 0.0
    %1041 = vmatmul.mubr.f32.gmra.mxu0 %v723
    %v1042 = vpop.f32.mrf.mxu0
    %v1043 = vadd.f32 %v882, %v1042
    %v1044 = vpop.f32.mrf.mxu0
    %v1045 = vadd.f32 %v884, %v1044
    %1046 = vdwg.mxu0
    %v1047 = vmul.f32 %v953, 0.2
    %v1048 = vmul.f32 %v955, 0.2
    %v1049 = vmul.f32 %v959, 0.2
    %v1050 = vmul.f32 %v961, 0.2
    %v1051 = vmul.f32 %v965, 0.2
    %v1052 = vmul.f32 %v967, 0.2
    %v1053 = vmul.f32 %v971, 0.2
    %v1054 = vmul.f32 %v973, 0.2
    %v1055 = vmul.f32 %v977, 0.2
    %v1056 = vmul.f32 %v979, 0.2
    %v1057 = vmul.f32 %v983, 0.2
    %v1058 = vmul.f32 %v985, 0.2
    %v1059 = vmul.f32 %v989, 0.2
    %v1060 = vmul.f32 %v991, 0.2
    %v1061 = vmul.f32 %v995, 0.2
    %v1062 = vmul.f32 %v997, 0.2
    %v1063 = vmul.f32 %v1001, 0.2
    %v1064 = vmul.f32 %v1003, 0.2
    %v1065 = vmul.f32 %v1007, 0.2
    %v1066 = vmul.f32 %v1009, 0.2
    %v1067 = vmul.f32 %v1013, 0.2
    %v1068 = vmul.f32 %v1015, 0.2
    %v1069 = vmul.f32 %v1019, 0.2
    %v1070 = vmul.f32 %v1021, 0.2
    %v1071 = vmul.f32 %v1025, 0.2
    %v1072 = vmul.f32 %v1027, 0.2
    %v1073 = vmul.f32 %v1031, 0.2
    %v1074 = vmul.f32 %v1033, 0.2
    %v1075 = vmul.f32 %v1037, 0.2
    %v1076 = vmul.f32 %v1039, 0.2
    %v1077 = vmul.f32 %v1043, 0.2
    %v1078 = vmul.f32 %v1045, 0.2
    %v1079 = vmax.f32 %v953, %v1047
    %v1080 = vmax.f32 %v955, %v1048
    %v1081 = vmax.f32 %v959, %v1049
    %v1082 = vmax.f32 %v961, %v1050
    %v1083 = vmax.f32 %v965, %v1051
    %v1084 = vmax.f32 %v967, %v1052
    %v1085 = vmax.f32 %v971, %v1053
    %v1086 = vmax.f32 %v973, %v1054
    %v1087 = vmax.f32 %v977, %v1055
    %v1088 = vmax.f32 %v979, %v1056
    %v1089 = vmax.f32 %v983, %v1057
    %v1090 = vmax.f32 %v985, %v1058
    %v1091 = vmax.f32 %v989, %v1059
    %v1092 = vmax.f32 %v991, %v1060
    %v1093 = vmax.f32 %v995, %v1061
    %v1094 = vmax.f32 %v997, %v1062
    %v1095 = vmax.f32 %v1001, %v1063
    %v1096 = vmax.f32 %v1003, %v1064
    %v1097 = vmax.f32 %v1007, %v1065
    %v1098 = vmax.f32 %v1009, %v1066
    %v1099 = vmax.f32 %v1013, %v1067
    %v1100 = vmax.f32 %v1015, %v1068
    %v1101 = vmax.f32 %v1019, %v1069
    %v1102 = vmax.f32 %v1021, %v1070
    %v1103 = vmax.f32 %v1025, %v1071
    %v1104 = vmax.f32 %v1027, %v1072
    %v1105 = vmax.f32 %v1031, %v1073
    %v1106 = vmax.f32 %v1033, %v1074
    %v1107 = vmax.f32 %v1037, %v1075
    %v1108 = vmax.f32 %v1039, %v1076
    %v1109 = vmax.f32 %v1043, %v1077
    %v1110 = vmax.f32 %v1045, %v1078
    %1111 = vrot.lane.b32.xlu0 %v1079, 2
    %v1112 = vpop.permute.xlu0 %1111
    %1113 = vrot.lane.b32.xlu0 %v1081, 2
    %v1114 = vpop.permute.xlu0 %1113
    %1115 = vrot.lane.b32.xlu0 %v1083, 2
    %v1116 = vpop.permute.xlu0 %1115
    %1117 = vrot.lane.b32.xlu0 %v1085, 2
    %v1118 = vpop.permute.xlu0 %1117
    %1119 = vrot.lane.b32.xlu0 %v1087, 2
    %v1120 = vpop.permute.xlu0 %1119
    %1121 = vrot.lane.b32.xlu0 %v1089, 2
    %v1122 = vpop.permute.xlu0 %1121
    %1123 = vrot.lane.b32.xlu0 %v1091, 2
    %v1124 = vpop.permute.xlu0 %1123
    %1125 = vrot.lane.b32.xlu0 %v1093, 2
    %v1126 = vpop.permute.xlu0 %1125
    %1127 = vrot.lane.b32.xlu0 %v1095, 2
    %v1128 = vpop.permute.xlu0 %1127
    %1129 = vrot.lane.b32.xlu0 %v1097, 2
    %v1130 = vpop.permute.xlu0 %1129
    %1131 = vrot.lane.b32.xlu0 %v1099, 2
    %v1132 = vpop.permute.xlu0 %1131
    %1133 = vrot.lane.b32.xlu0 %v1101, 2
    %v1134 = vpop.permute.xlu0 %1133
    %1135 = vrot.lane.b32.xlu0 %v1103, 2
    %v1136 = vpop.permute.xlu0 %1135
    %1137 = vrot.lane.b32.xlu0 %v1105, 2
    %v1138 = vpop.permute.xlu0 %1137
    %1139 = vrot.lane.b32.xlu0 %v1107, 2
    %v1140 = vpop.permute.xlu0 %1139
    %1141 = vrot.lane.b32.xlu0 %v1109, 2
    %v1142 = vpop.permute.xlu0 %1141
    %1143 = vrot.lane.b32.xlu0 %v1080, 2
    %v1144 = vpop.permute.xlu0 %1143
    %1145 = vrot.lane.b32.xlu0 %v1082, 2
    %v1146 = vpop.permute.xlu0 %1145
    %1147 = vrot.lane.b32.xlu0 %v1084, 2
    %v1148 = vpop.permute.xlu0 %1147
    %1149 = vrot.lane.b32.xlu0 %v1086, 2
    %v1150 = vpop.permute.xlu0 %1149
    %1151 = vrot.lane.b32.xlu0 %v1088, 2
    %v1152 = vpop.permute.xlu0 %1151
    %1153 = vrot.lane.b32.xlu0 %v1090, 2
    %v1154 = vpop.permute.xlu0 %1153
    %1155 = vrot.lane.b32.xlu0 %v1092, 2
    %v1156 = vpop.permute.xlu0 %1155
    %1157 = vrot.lane.b32.xlu0 %v1094, 2
    %v1158 = vpop.permute.xlu0 %1157
    %1159 = vrot.lane.b32.xlu0 %v1096, 2
    %v1160 = vpop.permute.xlu0 %1159
    %1161 = vrot.lane.b32.xlu0 %v1098, 2
    %v1162 = vpop.permute.xlu0 %1161
    %1163 = vrot.lane.b32.xlu0 %v1100, 2
    %v1164 = vpop.permute.xlu0 %1163
    %1165 = vrot.lane.b32.xlu0 %v1102, 2
    %v1166 = vpop.permute.xlu0 %1165
    %1167 = vrot.lane.b32.xlu0 %v1104, 2
    %v1168 = vpop.permute.xlu0 %1167
    %1169 = vrot.lane.b32.xlu0 %v1106, 2
    %v1170 = vpop.permute.xlu0 %1169
    %1171 = vrot.lane.b32.xlu0 %v1108, 2
    %v1172 = vpop.permute.xlu0 %1171
    %1173 = vrot.lane.b32.xlu0 %v1110, 2
    %v1174 = vpop.permute.xlu0 %1173
    %v1175 = vsel %vm85, %v1112, %v1144
    %v1176 = vsel %vm85, %v1114, %v1146
    %v1177 = vsel %vm85, %v1116, %v1148
    %v1178 = vsel %vm85, %v1118, %v1150
    %v1179 = vsel %vm85, %v1120, %v1152
    %v1180 = vsel %vm85, %v1122, %v1154
    %v1181 = vsel %vm85, %v1124, %v1156
    %v1182 = vsel %vm85, %v1126, %v1158
    %v1183 = vsel %vm85, %v1128, %v1160
    %v1184 = vsel %vm85, %v1130, %v1162
    %v1185 = vsel %vm85, %v1132, %v1164
    %v1186 = vsel %vm85, %v1134, %v1166
    %v1187 = vsel %vm85, %v1136, %v1168
    %v1188 = vsel %vm85, %v1138, %v1170
    %v1189 = vsel %vm85, %v1140, %v1172
    %v1190 = vsel %vm85, %v1142, %v1174
    %v1191 = vsel %vm85, %v1144, %v1112
    %v1192 = vsel %vm85, %v1146, %v1114
    %v1193 = vsel %vm85, %v1148, %v1116
    %v1194 = vsel %vm85, %v1150, %v1118
    %v1195 = vsel %vm85, %v1152, %v1120
    %v1196 = vsel %vm85, %v1154, %v1122
    %v1197 = vsel %vm85, %v1156, %v1124
    %v1198 = vsel %vm85, %v1158, %v1126
    %v1199 = vsel %vm85, %v1160, %v1128
    %v1200 = vsel %vm85, %v1162, %v1130
    %v1201 = vsel %vm85, %v1164, %v1132
    %v1202 = vsel %vm85, %v1166, %v1134
    %v1203 = vsel %vm85, %v1168, %v1136
    %v1204 = vsel %vm85, %v1170, %v1138
    %v1205 = vsel %vm85, %v1172, %v1140
    %v1206 = vsel %vm85, %v1174, %v1142
    %v1207 = vsel %vm405, %v1191, 0.0
    %v1208 = vsel %vm406, %v1175, 0.0
    %v1209 = vsel %vm405, %v1192, 0.0
    %v1210 = vsel %vm406, %v1176, 0.0
    %v1211 = vsel %vm405, %v1193, 0.0
    %v1212 = vsel %vm406, %v1177, 0.0
    %v1213 = vsel %vm405, %v1194, 0.0
    %v1214 = vsel %vm406, %v1178, 0.0
    %v1215 = vsel %vm405, %v1195, 0.0
    %v1216 = vsel %vm406, %v1179, 0.0
    %v1217 = vsel %vm405, %v1196, 0.0
    %v1218 = vsel %vm406, %v1180, 0.0
    %v1219 = vsel %vm405, %v1197, 0.0
    %v1220 = vsel %vm406, %v1181, 0.0
    %v1221 = vsel %vm405, %v1198, 0.0
    %v1222 = vsel %vm406, %v1182, 0.0
    %v1223 = vsel %vm405, %v1199, 0.0
    %v1224 = vsel %vm406, %v1183, 0.0
    %v1225 = vsel %vm405, %v1200, 0.0
    %v1226 = vsel %vm406, %v1184, 0.0
    %v1227 = vsel %vm405, %v1201, 0.0
    %v1228 = vsel %vm406, %v1185, 0.0
    %v1229 = vsel %vm405, %v1202, 0.0
    %v1230 = vsel %vm406, %v1186, 0.0
    %v1231 = vsel %vm405, %v1203, 0.0
    %v1232 = vsel %vm406, %v1187, 0.0
    %v1233 = vsel %vm405, %v1204, 0.0
    %v1234 = vsel %vm406, %v1188, 0.0
    %v1235 = vsel %vm405, %v1205, 0.0
    %v1236 = vsel %vm406, %v1189, 0.0
    %v1237 = vsel %vm405, %v1206, 0.0
    %v1238 = vsel %vm406, %v1190, 0.0
    %1239 = vrot.lane.b32.xlu0 %v1079, 1
    %v1240 = vpop.permute.xlu0 %1239
    %1241 = vrot.lane.b32.xlu0 %v1081, 1
    %v1242 = vpop.permute.xlu0 %1241
    %1243 = vrot.lane.b32.xlu0 %v1083, 1
    %v1244 = vpop.permute.xlu0 %1243
    %1245 = vrot.lane.b32.xlu0 %v1085, 1
    %v1246 = vpop.permute.xlu0 %1245
    %1247 = vrot.lane.b32.xlu0 %v1087, 1
    %v1248 = vpop.permute.xlu0 %1247
    %1249 = vrot.lane.b32.xlu0 %v1089, 1
    %v1250 = vpop.permute.xlu0 %1249
    %1251 = vrot.lane.b32.xlu0 %v1091, 1
    %v1252 = vpop.permute.xlu0 %1251
    %1253 = vrot.lane.b32.xlu0 %v1093, 1
    %v1254 = vpop.permute.xlu0 %1253
    %1255 = vrot.lane.b32.xlu0 %v1095, 1
    %v1256 = vpop.permute.xlu0 %1255
    %1257 = vrot.lane.b32.xlu0 %v1097, 1
    %v1258 = vpop.permute.xlu0 %1257
    %1259 = vrot.lane.b32.xlu0 %v1099, 1
    %v1260 = vpop.permute.xlu0 %1259
    %1261 = vrot.lane.b32.xlu0 %v1101, 1
    %v1262 = vpop.permute.xlu0 %1261
    %1263 = vrot.lane.b32.xlu0 %v1103, 1
    %v1264 = vpop.permute.xlu0 %1263
    %1265 = vrot.lane.b32.xlu0 %v1105, 1
    %v1266 = vpop.permute.xlu0 %1265
    %1267 = vrot.lane.b32.xlu0 %v1107, 1
    %v1268 = vpop.permute.xlu0 %1267
    %1269 = vrot.lane.b32.xlu0 %v1109, 1
    %v1270 = vpop.permute.xlu0 %1269
    %1271 = vrot.lane.b32.xlu0 %v1080, 1
    %v1272 = vpop.permute.xlu0 %1271
    %1273 = vrot.lane.b32.xlu0 %v1082, 1
    %v1274 = vpop.permute.xlu0 %1273
    %1275 = vrot.lane.b32.xlu0 %v1084, 1
    %v1276 = vpop.permute.xlu0 %1275
    %1277 = vrot.lane.b32.xlu0 %v1086, 1
    %v1278 = vpop.permute.xlu0 %1277
    %1279 = vrot.lane.b32.xlu0 %v1088, 1
    %v1280 = vpop.permute.xlu0 %1279
    %1281 = vrot.lane.b32.xlu0 %v1090, 1
    %v1282 = vpop.permute.xlu0 %1281
    %1283 = vrot.lane.b32.xlu0 %v1092, 1
    %v1284 = vpop.permute.xlu0 %1283
    %1285 = vrot.lane.b32.xlu0 %v1094, 1
    %v1286 = vpop.permute.xlu0 %1285
    %1287 = vrot.lane.b32.xlu0 %v1096, 1
    %v1288 = vpop.permute.xlu0 %1287
    %1289 = vrot.lane.b32.xlu0 %v1098, 1
    %v1290 = vpop.permute.xlu0 %1289
    %1291 = vrot.lane.b32.xlu0 %v1100, 1
    %v1292 = vpop.permute.xlu0 %1291
    %1293 = vrot.lane.b32.xlu0 %v1102, 1
    %v1294 = vpop.permute.xlu0 %1293
    %1295 = vrot.lane.b32.xlu0 %v1104, 1
    %v1296 = vpop.permute.xlu0 %1295
    %1297 = vrot.lane.b32.xlu0 %v1106, 1
    %v1298 = vpop.permute.xlu0 %1297
    %1299 = vrot.lane.b32.xlu0 %v1108, 1
    %v1300 = vpop.permute.xlu0 %1299
    %1301 = vrot.lane.b32.xlu0 %v1110, 1
    %v1302 = vpop.permute.xlu0 %1301
    %v1303 = vsel %vm94, %v1240, %v1272
    %v1304 = vsel %vm94, %v1242, %v1274
    %v1305 = vsel %vm94, %v1244, %v1276
    %v1306 = vsel %vm94, %v1246, %v1278
    %v1307 = vsel %vm94, %v1248, %v1280
    %v1308 = vsel %vm94, %v1250, %v1282
    %v1309 = vsel %vm94, %v1252, %v1284
    %v1310 = vsel %vm94, %v1254, %v1286
    %v1311 = vsel %vm94, %v1256, %v1288
    %v1312 = vsel %vm94, %v1258, %v1290
    %v1313 = vsel %vm94, %v1260, %v1292
    %v1314 = vsel %vm94, %v1262, %v1294
    %v1315 = vsel %vm94, %v1264, %v1296
    %v1316 = vsel %vm94, %v1266, %v1298
    %v1317 = vsel %vm94, %v1268, %v1300
    %v1318 = vsel %vm94, %v1270, %v1302
    %v1319 = vsel %vm94, %v1272, %v1240
    %v1320 = vsel %vm94, %v1274, %v1242
    %v1321 = vsel %vm94, %v1276, %v1244
    %v1322 = vsel %vm94, %v1278, %v1246
    %v1323 = vsel %vm94, %v1280, %v1248
    %v1324 = vsel %vm94, %v1282, %v1250
    %v1325 = vsel %vm94, %v1284, %v1252
    %v1326 = vsel %vm94, %v1286, %v1254
    %v1327 = vsel %vm94, %v1288, %v1256
    %v1328 = vsel %vm94, %v1290, %v1258
    %v1329 = vsel %vm94, %v1292, %v1260
    %v1330 = vsel %vm94, %v1294, %v1262
    %v1331 = vsel %vm94, %v1296, %v1264
    %v1332 = vsel %vm94, %v1298, %v1266
    %v1333 = vsel %vm94, %v1300, %v1268
    %v1334 = vsel %vm94, %v1302, %v1270
    %v1335 = vsel %vm473, %v1319, 0.0
    %v1336 = vsel %vm474, %v1303, 0.0
    %v1337 = vsel %vm473, %v1320, 0.0
    %v1338 = vsel %vm474, %v1304, 0.0
    %v1339 = vsel %vm473, %v1321, 0.0
    %v1340 = vsel %vm474, %v1305, 0.0
    %v1341 = vsel %vm473, %v1322, 0.0
    %v1342 = vsel %vm474, %v1306, 0.0
    %v1343 = vsel %vm473, %v1323, 0.0
    %v1344 = vsel %vm474, %v1307, 0.0
    %v1345 = vsel %vm473, %v1324, 0.0
    %v1346 = vsel %vm474, %v1308, 0.0
    %v1347 = vsel %vm473, %v1325, 0.0
    %v1348 = vsel %vm474, %v1309, 0.0
    %v1349 = vsel %vm473, %v1326, 0.0
    %v1350 = vsel %vm474, %v1310, 0.0
    %v1351 = vsel %vm473, %v1327, 0.0
    %v1352 = vsel %vm474, %v1311, 0.0
    %v1353 = vsel %vm473, %v1328, 0.0
    %v1354 = vsel %vm474, %v1312, 0.0
    %v1355 = vsel %vm473, %v1329, 0.0
    %v1356 = vsel %vm474, %v1313, 0.0
    %v1357 = vsel %vm473, %v1330, 0.0
    %v1358 = vsel %vm474, %v1314, 0.0
    %v1359 = vsel %vm473, %v1331, 0.0
    %v1360 = vsel %vm474, %v1315, 0.0
    %v1361 = vsel %vm473, %v1332, 0.0
    %v1362 = vsel %vm474, %v1316, 0.0
    %v1363 = vsel %vm473, %v1333, 0.0
    %v1364 = vsel %vm474, %v1317, 0.0
    %v1365 = vsel %vm473, %v1334, 0.0
    %v1366 = vsel %vm474, %v1318, 0.0
    %1367 = vrot.lane.b32.xlu0 %v1079, 127
    %v1368 = vpop.permute.xlu0 %1367
    %1369 = vrot.lane.b32.xlu0 %v1081, 127
    %v1370 = vpop.permute.xlu0 %1369
    %1371 = vrot.lane.b32.xlu0 %v1083, 127
    %v1372 = vpop.permute.xlu0 %1371
    %1373 = vrot.lane.b32.xlu0 %v1085, 127
    %v1374 = vpop.permute.xlu0 %1373
    %1375 = vrot.lane.b32.xlu0 %v1087, 127
    %v1376 = vpop.permute.xlu0 %1375
    %1377 = vrot.lane.b32.xlu0 %v1089, 127
    %v1378 = vpop.permute.xlu0 %1377
    %1379 = vrot.lane.b32.xlu0 %v1091, 127
    %v1380 = vpop.permute.xlu0 %1379
    %1381 = vrot.lane.b32.xlu0 %v1093, 127
    %v1382 = vpop.permute.xlu0 %1381
    %1383 = vrot.lane.b32.xlu0 %v1095, 127
    %v1384 = vpop.permute.xlu0 %1383
    %1385 = vrot.lane.b32.xlu0 %v1097, 127
    %v1386 = vpop.permute.xlu0 %1385
    %1387 = vrot.lane.b32.xlu0 %v1099, 127
    %v1388 = vpop.permute.xlu0 %1387
    %1389 = vrot.lane.b32.xlu0 %v1101, 127
    %v1390 = vpop.permute.xlu0 %1389
    %1391 = vrot.lane.b32.xlu0 %v1103, 127
    %v1392 = vpop.permute.xlu0 %1391
    %1393 = vrot.lane.b32.xlu0 %v1105, 127
    %v1394 = vpop.permute.xlu0 %1393
    %1395 = vrot.lane.b32.xlu0 %v1107, 127
    %v1396 = vpop.permute.xlu0 %1395
    %1397 = vrot.lane.b32.xlu0 %v1109, 127
    %v1398 = vpop.permute.xlu0 %1397
    %1399 = vrot.lane.b32.xlu0 %v1080, 127
    %v1400 = vpop.permute.xlu0 %1399
    %1401 = vrot.lane.b32.xlu0 %v1082, 127
    %v1402 = vpop.permute.xlu0 %1401
    %1403 = vrot.lane.b32.xlu0 %v1084, 127
    %v1404 = vpop.permute.xlu0 %1403
    %1405 = vrot.lane.b32.xlu0 %v1086, 127
    %v1406 = vpop.permute.xlu0 %1405
    %1407 = vrot.lane.b32.xlu0 %v1088, 127
    %v1408 = vpop.permute.xlu0 %1407
    %1409 = vrot.lane.b32.xlu0 %v1090, 127
    %v1410 = vpop.permute.xlu0 %1409
    %1411 = vrot.lane.b32.xlu0 %v1092, 127
    %v1412 = vpop.permute.xlu0 %1411
    %1413 = vrot.lane.b32.xlu0 %v1094, 127
    %v1414 = vpop.permute.xlu0 %1413
    %1415 = vrot.lane.b32.xlu0 %v1096, 127
    %v1416 = vpop.permute.xlu0 %1415
    %1417 = vrot.lane.b32.xlu0 %v1098, 127
    %v1418 = vpop.permute.xlu0 %1417
    %1419 = vrot.lane.b32.xlu0 %v1100, 127
    %v1420 = vpop.permute.xlu0 %1419
    %1421 = vrot.lane.b32.xlu0 %v1102, 127
    %v1422 = vpop.permute.xlu0 %1421
    %1423 = vrot.lane.b32.xlu0 %v1104, 127
    %v1424 = vpop.permute.xlu0 %1423
    %1425 = vrot.lane.b32.xlu0 %v1106, 127
    %v1426 = vpop.permute.xlu0 %1425
    %1427 = vrot.lane.b32.xlu0 %v1108, 127
    %v1428 = vpop.permute.xlu0 %1427
    %1429 = vrot.lane.b32.xlu0 %v1110, 127
    %v1430 = vpop.permute.xlu0 %1429
    %v1431 = vsel %vm103, %v1368, %v1400
    %v1432 = vsel %vm103, %v1370, %v1402
    %v1433 = vsel %vm103, %v1372, %v1404
    %v1434 = vsel %vm103, %v1374, %v1406
    %v1435 = vsel %vm103, %v1376, %v1408
    %v1436 = vsel %vm103, %v1378, %v1410
    %v1437 = vsel %vm103, %v1380, %v1412
    %v1438 = vsel %vm103, %v1382, %v1414
    %v1439 = vsel %vm103, %v1384, %v1416
    %v1440 = vsel %vm103, %v1386, %v1418
    %v1441 = vsel %vm103, %v1388, %v1420
    %v1442 = vsel %vm103, %v1390, %v1422
    %v1443 = vsel %vm103, %v1392, %v1424
    %v1444 = vsel %vm103, %v1394, %v1426
    %v1445 = vsel %vm103, %v1396, %v1428
    %v1446 = vsel %vm103, %v1398, %v1430
    %v1447 = vsel %vm103, %v1400, %v1368
    %v1448 = vsel %vm103, %v1402, %v1370
    %v1449 = vsel %vm103, %v1404, %v1372
    %v1450 = vsel %vm103, %v1406, %v1374
    %v1451 = vsel %vm103, %v1408, %v1376
    %v1452 = vsel %vm103, %v1410, %v1378
    %v1453 = vsel %vm103, %v1412, %v1380
    %v1454 = vsel %vm103, %v1414, %v1382
    %v1455 = vsel %vm103, %v1416, %v1384
    %v1456 = vsel %vm103, %v1418, %v1386
    %v1457 = vsel %vm103, %v1420, %v1388
    %v1458 = vsel %vm103, %v1422, %v1390
    %v1459 = vsel %vm103, %v1424, %v1392
    %v1460 = vsel %vm103, %v1426, %v1394
    %v1461 = vsel %vm103, %v1428, %v1396
    %v1462 = vsel %vm103, %v1430, %v1398
    %v1463 = vsel %vm541, %v1431, 0.0
    %v1464 = vsel %vm542, %v1447, 0.0
    %v1465 = vsel %vm541, %v1432, 0.0
    %v1466 = vsel %vm542, %v1448, 0.0
    %v1467 = vsel %vm541, %v1433, 0.0
    %v1468 = vsel %vm542, %v1449, 0.0
    %v1469 = vsel %vm541, %v1434, 0.0
    %v1470 = vsel %vm542, %v1450, 0.0
    %v1471 = vsel %vm541, %v1435, 0.0
    %v1472 = vsel %vm542, %v1451, 0.0
    %v1473 = vsel %vm541, %v1436, 0.0
    %v1474 = vsel %vm542, %v1452, 0.0
    %v1475 = vsel %vm541, %v1437, 0.0
    %v1476 = vsel %vm542, %v1453, 0.0
    %v1477 = vsel %vm541, %v1438, 0.0
    %v1478 = vsel %vm542, %v1454, 0.0
    %v1479 = vsel %vm541, %v1439, 0.0
    %v1480 = vsel %vm542, %v1455, 0.0
    %v1481 = vsel %vm541, %v1440, 0.0
    %v1482 = vsel %vm542, %v1456, 0.0
    %v1483 = vsel %vm541, %v1441, 0.0
    %v1484 = vsel %vm542, %v1457, 0.0
    %v1485 = vsel %vm541, %v1442, 0.0
    %v1486 = vsel %vm542, %v1458, 0.0
    %v1487 = vsel %vm541, %v1443, 0.0
    %v1488 = vsel %vm542, %v1459, 0.0
    %v1489 = vsel %vm541, %v1444, 0.0
    %v1490 = vsel %vm542, %v1460, 0.0
    %v1491 = vsel %vm541, %v1445, 0.0
    %v1492 = vsel %vm542, %v1461, 0.0
    %v1493 = vsel %vm541, %v1446, 0.0
    %v1494 = vsel %vm542, %v1462, 0.0
    %1495 = vrot.lane.b32.xlu0 %v1079, 126
    %v1496 = vpop.permute.xlu0 %1495
    %1497 = vrot.lane.b32.xlu0 %v1081, 126
    %v1498 = vpop.permute.xlu0 %1497
    %1499 = vrot.lane.b32.xlu0 %v1083, 126
    %v1500 = vpop.permute.xlu0 %1499
    %1501 = vrot.lane.b32.xlu0 %v1085, 126
    %v1502 = vpop.permute.xlu0 %1501
    %1503 = vrot.lane.b32.xlu0 %v1087, 126
    %v1504 = vpop.permute.xlu0 %1503
    %1505 = vrot.lane.b32.xlu0 %v1089, 126
    %v1506 = vpop.permute.xlu0 %1505
    %1507 = vrot.lane.b32.xlu0 %v1091, 126
    %v1508 = vpop.permute.xlu0 %1507
    %1509 = vrot.lane.b32.xlu0 %v1093, 126
    %v1510 = vpop.permute.xlu0 %1509
    %1511 = vrot.lane.b32.xlu0 %v1095, 126
    %v1512 = vpop.permute.xlu0 %1511
    %1513 = vrot.lane.b32.xlu0 %v1097, 126
    %v1514 = vpop.permute.xlu0 %1513
    %1515 = vrot.lane.b32.xlu0 %v1099, 126
    %v1516 = vpop.permute.xlu0 %1515
    %1517 = vrot.lane.b32.xlu0 %v1101, 126
    %v1518 = vpop.permute.xlu0 %1517
    %1519 = vrot.lane.b32.xlu0 %v1103, 126
    %v1520 = vpop.permute.xlu0 %1519
    %1521 = vrot.lane.b32.xlu0 %v1105, 126
    %v1522 = vpop.permute.xlu0 %1521
    %1523 = vrot.lane.b32.xlu0 %v1107, 126
    %v1524 = vpop.permute.xlu0 %1523
    %1525 = vrot.lane.b32.xlu0 %v1109, 126
    %v1526 = vpop.permute.xlu0 %1525
    %1527 = vrot.lane.b32.xlu0 %v1080, 126
    %v1528 = vpop.permute.xlu0 %1527
    %1529 = vrot.lane.b32.xlu0 %v1082, 126
    %v1530 = vpop.permute.xlu0 %1529
    %1531 = vrot.lane.b32.xlu0 %v1084, 126
    %v1532 = vpop.permute.xlu0 %1531
    %1533 = vrot.lane.b32.xlu0 %v1086, 126
    %v1534 = vpop.permute.xlu0 %1533
    %1535 = vrot.lane.b32.xlu0 %v1088, 126
    %v1536 = vpop.permute.xlu0 %1535
    %1537 = vrot.lane.b32.xlu0 %v1090, 126
    %v1538 = vpop.permute.xlu0 %1537
    %1539 = vrot.lane.b32.xlu0 %v1092, 126
    %v1540 = vpop.permute.xlu0 %1539
    %1541 = vrot.lane.b32.xlu0 %v1094, 126
    %v1542 = vpop.permute.xlu0 %1541
    %1543 = vrot.lane.b32.xlu0 %v1096, 126
    %v1544 = vpop.permute.xlu0 %1543
    %1545 = vrot.lane.b32.xlu0 %v1098, 126
    %v1546 = vpop.permute.xlu0 %1545
    %1547 = vrot.lane.b32.xlu0 %v1100, 126
    %v1548 = vpop.permute.xlu0 %1547
    %1549 = vrot.lane.b32.xlu0 %v1102, 126
    %v1550 = vpop.permute.xlu0 %1549
    %1551 = vrot.lane.b32.xlu0 %v1104, 126
    %v1552 = vpop.permute.xlu0 %1551
    %1553 = vrot.lane.b32.xlu0 %v1106, 126
    %v1554 = vpop.permute.xlu0 %1553
    %1555 = vrot.lane.b32.xlu0 %v1108, 126
    %v1556 = vpop.permute.xlu0 %1555
    %1557 = vrot.lane.b32.xlu0 %v1110, 126
    %v1558 = vpop.permute.xlu0 %1557
    %v1559 = vsel %vm112, %v1496, %v1528
    %v1560 = vsel %vm112, %v1498, %v1530
    %v1561 = vsel %vm112, %v1500, %v1532
    %v1562 = vsel %vm112, %v1502, %v1534
    %v1563 = vsel %vm112, %v1504, %v1536
    %v1564 = vsel %vm112, %v1506, %v1538
    %v1565 = vsel %vm112, %v1508, %v1540
    %v1566 = vsel %vm112, %v1510, %v1542
    %v1567 = vsel %vm112, %v1512, %v1544
    %v1568 = vsel %vm112, %v1514, %v1546
    %v1569 = vsel %vm112, %v1516, %v1548
    %v1570 = vsel %vm112, %v1518, %v1550
    %v1571 = vsel %vm112, %v1520, %v1552
    %v1572 = vsel %vm112, %v1522, %v1554
    %v1573 = vsel %vm112, %v1524, %v1556
    %v1574 = vsel %vm112, %v1526, %v1558
    %v1575 = vsel %vm112, %v1528, %v1496
    %v1576 = vsel %vm112, %v1530, %v1498
    %v1577 = vsel %vm112, %v1532, %v1500
    %v1578 = vsel %vm112, %v1534, %v1502
    %v1579 = vsel %vm112, %v1536, %v1504
    %v1580 = vsel %vm112, %v1538, %v1506
    %v1581 = vsel %vm112, %v1540, %v1508
    %v1582 = vsel %vm112, %v1542, %v1510
    %v1583 = vsel %vm112, %v1544, %v1512
    %v1584 = vsel %vm112, %v1546, %v1514
    %v1585 = vsel %vm112, %v1548, %v1516
    %v1586 = vsel %vm112, %v1550, %v1518
    %v1587 = vsel %vm112, %v1552, %v1520
    %v1588 = vsel %vm112, %v1554, %v1522
    %v1589 = vsel %vm112, %v1556, %v1524
    %v1590 = vsel %vm112, %v1558, %v1526
    %v1591 = vsel %vm609, %v1559, 0.0
    %v1592 = vsel %vm610, %v1575, 0.0
    %v1593 = vsel %vm609, %v1560, 0.0
    %v1594 = vsel %vm610, %v1576, 0.0
    %v1595 = vsel %vm609, %v1561, 0.0
    %v1596 = vsel %vm610, %v1577, 0.0
    %v1597 = vsel %vm609, %v1562, 0.0
    %v1598 = vsel %vm610, %v1578, 0.0
    %v1599 = vsel %vm609, %v1563, 0.0
    %v1600 = vsel %vm610, %v1579, 0.0
    %v1601 = vsel %vm609, %v1564, 0.0
    %v1602 = vsel %vm610, %v1580, 0.0
    %v1603 = vsel %vm609, %v1565, 0.0
    %v1604 = vsel %vm610, %v1581, 0.0
    %v1605 = vsel %vm609, %v1566, 0.0
    %v1606 = vsel %vm610, %v1582, 0.0
    %v1607 = vsel %vm609, %v1567, 0.0
    %v1608 = vsel %vm610, %v1583, 0.0
    %v1609 = vsel %vm609, %v1568, 0.0
    %v1610 = vsel %vm610, %v1584, 0.0
    %v1611 = vsel %vm609, %v1569, 0.0
    %v1612 = vsel %vm610, %v1585, 0.0
    %v1613 = vsel %vm609, %v1570, 0.0
    %v1614 = vsel %vm610, %v1586, 0.0
    %v1615 = vsel %vm609, %v1571, 0.0
    %v1616 = vsel %vm610, %v1587, 0.0
    %v1617 = vsel %vm609, %v1572, 0.0
    %v1618 = vsel %vm610, %v1588, 0.0
    %v1619 = vsel %vm609, %v1573, 0.0
    %v1620 = vsel %vm610, %v1589, 0.0
    %v1621 = vsel %vm609, %v1574, 0.0
    %v1622 = vsel %vm610, %v1590, 0.0
    %v1623 = vld [vmem:[%s3] sm:$0xff]
    %v1624 = vld [vmem:[%s3 + $0x8] sm:$0xff]
    %v1625 = vld [vmem:[%s3 + $0x10] sm:$0xff]
    %v1626 = vld [vmem:[%s3 + $0x18] sm:$0xff]
    %v1627 = vld [vmem:[%s3 + $0x20] sm:$0xff]
    %v1628 = vld [vmem:[%s3 + $0x28] sm:$0xff]
    %v1629 = vld [vmem:[%s3 + $0x30] sm:$0xff]
    %v1630 = vld [vmem:[%s3 + $0x38] sm:$0xff]
    %v1631 = vld [vmem:[%s3 + $0x40] sm:$0xff]
    %v1632 = vld [vmem:[%s3 + $0x48] sm:$0xff]
    %v1633 = vld [vmem:[%s3 + $0x50] sm:$0xff]
    %v1634 = vld [vmem:[%s3 + $0x58] sm:$0xff]
    %v1635 = vld [vmem:[%s3 + $0x60] sm:$0xff]
    %v1636 = vld [vmem:[%s3 + $0x68] sm:$0xff]
    %v1637 = vld [vmem:[%s3 + $0x70] sm:$0xff]
    %v1638 = vld [vmem:[%s3 + $0x78] sm:$0xff]
    %v1639 = vld [vmem:[%s3 + $0x80] sm:$0xff]
    %v1640 = vld [vmem:[%s3 + $0x88] sm:$0xff]
    %v1641 = vld [vmem:[%s3 + $0x90] sm:$0xff]
    %v1642 = vld [vmem:[%s3 + $0x98] sm:$0xff]
    %v1643 = vld [vmem:[%s3 + $0xa0] sm:$0xff]
    %v1644 = vld [vmem:[%s3 + $0xa8] sm:$0xff]
    %v1645 = vld [vmem:[%s3 + $0xb0] sm:$0xff]
    %v1646 = vld [vmem:[%s3 + $0xb8] sm:$0xff]
    %v1647 = vld [vmem:[%s3 + $0xc0] sm:$0xff]
    %v1648 = vld [vmem:[%s3 + $0xc8] sm:$0xff]
    %v1649 = vld [vmem:[%s3 + $0xd0] sm:$0xff]
    %v1650 = vld [vmem:[%s3 + $0xd8] sm:$0xff]
    %v1651 = vld [vmem:[%s3 + $0xe0] sm:$0xff]
    %v1652 = vld [vmem:[%s3 + $0xe8] sm:$0xff]
    %v1653 = vld [vmem:[%s3 + $0xf0] sm:$0xff]
    %v1654 = vld [vmem:[%s3 + $0xf8] sm:$0xff]
    %v1655 = vld [vmem:[%s3 + $0x100] sm:$0xff]
    %v1656 = vld [vmem:[%s3 + $0x108] sm:$0xff]
    %v1657 = vld [vmem:[%s3 + $0x110] sm:$0xff]
    %v1658 = vld [vmem:[%s3 + $0x118] sm:$0xff]
    %v1659 = vld [vmem:[%s3 + $0x120] sm:$0xff]
    %v1660 = vld [vmem:[%s3 + $0x128] sm:$0xff]
    %v1661 = vld [vmem:[%s3 + $0x130] sm:$0xff]
    %v1662 = vld [vmem:[%s3 + $0x138] sm:$0xff]
    %v1663 = vld [vmem:[%s3 + $0x140] sm:$0xff]
    %v1664 = vld [vmem:[%s3 + $0x148] sm:$0xff]
    %v1665 = vld [vmem:[%s3 + $0x150] sm:$0xff]
    %v1666 = vld [vmem:[%s3 + $0x158] sm:$0xff]
    %v1667 = vld [vmem:[%s3 + $0x160] sm:$0xff]
    %v1668 = vld [vmem:[%s3 + $0x168] sm:$0xff]
    %v1669 = vld [vmem:[%s3 + $0x170] sm:$0xff]
    %v1670 = vld [vmem:[%s3 + $0x178] sm:$0xff]
    %v1672 = vsel %vm185, %v1628, 0
    %v1675 = vsel %vm185, %v1634, 0
    %v1678 = vsel %vm185, %v1640, 0
    %v1681 = vsel %vm185, %v1646, 0
    %v1684 = vsel %vm185, %v1652, 0
    %v1687 = vsel %vm185, %v1658, 0
    %v1690 = vsel %vm185, %v1664, 0
    %v1693 = vsel %vm185, %v1670, 0
    %1695 = vmatprep.subr.mxu0 %v1238
    %1696 = vmatpush1.msra.mxu0 %v1237
    %1697 = vmatprep.subr.mxu0 %v1236
    %1698 = vmatpush1.msra.mxu0 %v1235
    %1699 = vmatprep.subr.mxu0 %v1234
    %1700 = vmatpush1.msra.mxu0 %v1233
    %1701 = vmatprep.subr.mxu0 %v1232
    %1702 = vmatpush1.msra.mxu0 %v1231
    %1703 = vmatprep.subr.mxu0 %v1230
    %1704 = vmatpush1.msra.mxu0 %v1229
    %1705 = vmatprep.subr.mxu0 %v1228
    %1706 = vmatpush1.msra.mxu0 %v1227
    %1707 = vmatprep.subr.mxu0 %v1226
    %1708 = vmatpush1.msra.mxu0 %v1225
    %1709 = vmatprep.subr.mxu0 %v1224
    %1710 = vmatpush1.msra.mxu0 %v1223
    %1711 = vmatprep.subr.mxu0 %v1222
    %1712 = vmatpush1.msra.mxu0 %v1221
    %1713 = vmatprep.subr.mxu0 %v1220
    %1714 = vmatpush1.msra.mxu0 %v1219
    %1715 = vmatprep.subr.mxu0 %v1218
    %1716 = vmatpush1.msra.mxu0 %v1217
    %1717 = vmatprep.subr.mxu0 %v1216
    %1718 = vmatpush1.msra.mxu0 %v1215
    %1719 = vmatprep.subr.mxu0 %v1214
    %1720 = vmatpush1.msra.mxu0 %v1213
    %1721 = vmatprep.subr.mxu0 %v1212
    %1722 = vmatpush1.msra.mxu0 %v1211
    %1723 = vmatprep.subr.mxu0 %v1210
    %1724 = vmatpush1.msra.mxu0 %v1209
    %1725 = vmatprep.subr.mxu0 %v1208
    %1726 = vmatpush1.msra.mxu0 %v1207
    %1727 = vmatprep.subr.mxu0 %v1366
    %1728 = vmatpush2.msra.mxu0 %v1365
    %1729 = vmatprep.subr.mxu0 %v1364
    %1730 = vmatpush2.msra.mxu0 %v1363
    %1731 = vmatprep.subr.mxu0 %v1362
    %1732 = vmatpush2.msra.mxu0 %v1361
    %1733 = vmatprep.subr.mxu0 %v1360
    %1734 = vmatpush2.msra.mxu0 %v1359
    %1735 = vmatprep.subr.mxu0 %v1358
    %1736 = vmatpush2.msra.mxu0 %v1357
    %1737 = vmatprep.subr.mxu0 %v1356
    %1738 = vmatpush2.msra.mxu0 %v1355
    %1739 = vmatprep.subr.mxu0 %v1354
    %1740 = vmatpush2.msra.mxu0 %v1353
    %1741 = vmatprep.subr.mxu0 %v1352
    %1742 = vmatpush2.msra.mxu0 %v1351
    %1743 = vmatprep.subr.mxu0 %v1350
    %1744 = vmatpush2.msra.mxu0 %v1349
    %1745 = vmatprep.subr.mxu0 %v1348
    %1746 = vmatpush2.msra.mxu0 %v1347
    %1747 = vmatprep.subr.mxu0 %v1346
    %1748 = vmatpush2.msra.mxu0 %v1345
    %1749 = vmatprep.subr.mxu0 %v1344
    %1750 = vmatpush2.msra.mxu0 %v1343
    %1751 = vmatprep.subr.mxu0 %v1342
    %1752 = vmatpush2.msra.mxu0 %v1341
    %1753 = vmatprep.subr.mxu0 %v1340
    %1754 = vmatpush2.msra.mxu0 %v1339
    %1755 = vmatprep.subr.mxu0 %v1338
    %1756 = vmatpush2.msra.mxu0 %v1337
    %1757 = vmatprep.subr.mxu0 %v1336
    %1758 = vmatpush2.msra.mxu0 %v1335
    %1759 = vmatprep.mubr.f32.mxu0 %v1624
    %1760 = vmatmul.mubr.f32.gmra.mxu0 %v1623
    %v1761 = vpop.f32.mrf.mxu0
    %v1762 = vadd.f32 0.0, %v1761
    %v1763 = vpop.f32.mrf.mxu0
    %v1764 = vadd.f32 0.0, %v1763
    %1765 = vmatprep.mubr.f32.mxu0 %v1630
    %1766 = vmatmul.mubr.f32.gmra.mxu0 %v1629
    %v1767 = vpop.f32.mrf.mxu0
    %v1768 = vadd.f32 0.0, %v1767
    %v1769 = vpop.f32.mrf.mxu0
    %v1770 = vadd.f32 0.0, %v1769
    %1771 = vmatprep.mubr.f32.mxu0 %v1636
    %1772 = vmatmul.mubr.f32.gmra.mxu0 %v1635
    %v1773 = vpop.f32.mrf.mxu0
    %v1774 = vadd.f32 0.0, %v1773
    %v1775 = vpop.f32.mrf.mxu0
    %v1776 = vadd.f32 0.0, %v1775
    %1777 = vmatprep.mubr.f32.mxu0 %v1642
    %1778 = vmatmul.mubr.f32.gmra.mxu0 %v1641
    %v1779 = vpop.f32.mrf.mxu0
    %v1780 = vadd.f32 0.0, %v1779
    %v1781 = vpop.f32.mrf.mxu0
    %v1782 = vadd.f32 0.0, %v1781
    %1783 = vmatprep.mubr.f32.mxu0 %v1648
    %1784 = vmatmul.mubr.f32.gmra.mxu0 %v1647
    %v1785 = vpop.f32.mrf.mxu0
    %v1786 = vadd.f32 0.0, %v1785
    %v1787 = vpop.f32.mrf.mxu0
    %v1788 = vadd.f32 0.0, %v1787
    %1789 = vmatprep.mubr.f32.mxu0 %v1654
    %1790 = vmatmul.mubr.f32.gmra.mxu0 %v1653
    %v1791 = vpop.f32.mrf.mxu0
    %v1792 = vadd.f32 0.0, %v1791
    %v1793 = vpop.f32.mrf.mxu0
    %v1794 = vadd.f32 0.0, %v1793
    %1795 = vmatprep.mubr.f32.mxu0 %v1660
    %1796 = vmatmul.mubr.f32.gmra.mxu0 %v1659
    %v1797 = vpop.f32.mrf.mxu0
    %v1798 = vadd.f32 0.0, %v1797
    %v1799 = vpop.f32.mrf.mxu0
    %v1800 = vadd.f32 0.0, %v1799
    %1801 = vmatprep.mubr.f32.mxu0 %v1666
    %1802 = vmatmul.mubr.f32.gmra.mxu0 %v1665
    %v1803 = vpop.f32.mrf.mxu0
    %v1804 = vadd.f32 0.0, %v1803
    %v1805 = vpop.f32.mrf.mxu0
    %v1806 = vadd.f32 0.0, %v1805
    %1807 = vdwg.mxu0
    %1808 = vmatprep.subr.mxu0 %v1110
    %1809 = vmatpush1.msra.mxu0 %v1109
    %1810 = vmatprep.subr.mxu0 %v1108
    %1811 = vmatpush1.msra.mxu0 %v1107
    %1812 = vmatprep.subr.mxu0 %v1106
    %1813 = vmatpush1.msra.mxu0 %v1105
    %1814 = vmatprep.subr.mxu0 %v1104
    %1815 = vmatpush1.msra.mxu0 %v1103
    %1816 = vmatprep.subr.mxu0 %v1102
    %1817 = vmatpush1.msra.mxu0 %v1101
    %1818 = vmatprep.subr.mxu0 %v1100
    %1819 = vmatpush1.msra.mxu0 %v1099
    %1820 = vmatprep.subr.mxu0 %v1098
    %1821 = vmatpush1.msra.mxu0 %v1097
    %1822 = vmatprep.subr.mxu0 %v1096
    %1823 = vmatpush1.msra.mxu0 %v1095
    %1824 = vmatprep.subr.mxu0 %v1094
    %1825 = vmatpush1.msra.mxu0 %v1093
    %1826 = vmatprep.subr.mxu0 %v1092
    %1827 = vmatpush1.msra.mxu0 %v1091
    %1828 = vmatprep.subr.mxu0 %v1090
    %1829 = vmatpush1.msra.mxu0 %v1089
    %1830 = vmatprep.subr.mxu0 %v1088
    %1831 = vmatpush1.msra.mxu0 %v1087
    %1832 = vmatprep.subr.mxu0 %v1086
    %1833 = vmatpush1.msra.mxu0 %v1085
    %1834 = vmatprep.subr.mxu0 %v1084
    %1835 = vmatpush1.msra.mxu0 %v1083
    %1836 = vmatprep.subr.mxu0 %v1082
    %1837 = vmatpush1.msra.mxu0 %v1081
    %1838 = vmatprep.subr.mxu0 %v1080
    %1839 = vmatpush1.msra.mxu0 %v1079
    %1840 = vmatprep.subr.mxu0 %v1494
    %1841 = vmatpush2.msra.mxu0 %v1493
    %1842 = vmatprep.subr.mxu0 %v1492
    %1843 = vmatpush2.msra.mxu0 %v1491
    %1844 = vmatprep.subr.mxu0 %v1490
    %1845 = vmatpush2.msra.mxu0 %v1489
    %1846 = vmatprep.subr.mxu0 %v1488
    %1847 = vmatpush2.msra.mxu0 %v1487
    %1848 = vmatprep.subr.mxu0 %v1486
    %1849 = vmatpush2.msra.mxu0 %v1485
    %1850 = vmatprep.subr.mxu0 %v1484
    %1851 = vmatpush2.msra.mxu0 %v1483
    %1852 = vmatprep.subr.mxu0 %v1482
    %1853 = vmatpush2.msra.mxu0 %v1481
    %1854 = vmatprep.subr.mxu0 %v1480
    %1855 = vmatpush2.msra.mxu0 %v1479
    %1856 = vmatprep.subr.mxu0 %v1478
    %1857 = vmatpush2.msra.mxu0 %v1477
    %1858 = vmatprep.subr.mxu0 %v1476
    %1859 = vmatpush2.msra.mxu0 %v1475
    %1860 = vmatprep.subr.mxu0 %v1474
    %1861 = vmatpush2.msra.mxu0 %v1473
    %1862 = vmatprep.subr.mxu0 %v1472
    %1863 = vmatpush2.msra.mxu0 %v1471
    %1864 = vmatprep.subr.mxu0 %v1470
    %1865 = vmatpush2.msra.mxu0 %v1469
    %1866 = vmatprep.subr.mxu0 %v1468
    %1867 = vmatpush2.msra.mxu0 %v1467
    %1868 = vmatprep.subr.mxu0 %v1466
    %1869 = vmatpush2.msra.mxu0 %v1465
    %1870 = vmatprep.subr.mxu0 %v1464
    %1871 = vmatpush2.msra.mxu0 %v1463
    %1872 = vmatprep.mubr.f32.mxu0 %v1626
    %1873 = vmatmul.mubr.f32.gmra.mxu0 %v1625
    %v1874 = vpop.f32.mrf.mxu0
    %v1875 = vadd.f32 %v1762, %v1874
    %v1876 = vpop.f32.mrf.mxu0
    %v1877 = vadd.f32 %v1764, %v1876
    %1878 = vmatprep.mubr.f32.mxu0 %v1632
    %1879 = vmatmul.mubr.f32.gmra.mxu0 %v1631
    %v1880 = vpop.f32.mrf.mxu0
    %v1881 = vadd.f32 %v1768, %v1880
    %v1882 = vpop.f32.mrf.mxu0
    %v1883 = vadd.f32 %v1770, %v1882
    %1884 = vmatprep.mubr.f32.mxu0 %v1638
    %1885 = vmatmul.mubr.f32.gmra.mxu0 %v1637
    %v1886 = vpop.f32.mrf.mxu0
    %v1887 = vadd.f32 %v1774, %v1886
    %v1888 = vpop.f32.mrf.mxu0
    %v1889 = vadd.f32 %v1776, %v1888
    %1890 = vmatprep.mubr.f32.mxu0 %v1644
    %1891 = vmatmul.mubr.f32.gmra.mxu0 %v1643
    %v1892 = vpop.f32.mrf.mxu0
    %v1893 = vadd.f32 %v1780, %v1892
    %v1894 = vpop.f32.mrf.mxu0
    %v1895 = vadd.f32 %v1782, %v1894
    %1896 = vmatprep.mubr.f32.mxu0 %v1650
    %1897 = vmatmul.mubr.f32.gmra.mxu0 %v1649
    %v1898 = vpop.f32.mrf.mxu0
    %v1899 = vadd.f32 %v1786, %v1898
    %v1900 = vpop.f32.mrf.mxu0
    %v1901 = vadd.f32 %v1788, %v1900
    %1902 = vmatprep.mubr.f32.mxu0 %v1656
    %1903 = vmatmul.mubr.f32.gmra.mxu0 %v1655
    %v1904 = vpop.f32.mrf.mxu0
    %v1905 = vadd.f32 %v1792, %v1904
    %v1906 = vpop.f32.mrf.mxu0
    %v1907 = vadd.f32 %v1794, %v1906
    %1908 = vmatprep.mubr.f32.mxu0 %v1662
    %1909 = vmatmul.mubr.f32.gmra.mxu0 %v1661
    %v1910 = vpop.f32.mrf.mxu0
    %v1911 = vadd.f32 %v1798, %v1910
    %v1912 = vpop.f32.mrf.mxu0
    %v1913 = vadd.f32 %v1800, %v1912
    %1914 = vmatprep.mubr.f32.mxu0 %v1668
    %1915 = vmatmul.mubr.f32.gmra.mxu0 %v1667
    %v1916 = vpop.f32.mrf.mxu0
    %v1917 = vadd.f32 %v1804, %v1916
    %v1918 = vpop.f32.mrf.mxu0
    %v1919 = vadd.f32 %v1806, %v1918
    %1920 = vdwg.mxu0
    %1921 = vmatprep.subr.mxu0 %v1622
    %1922 = vmatpush1.msra.mxu0 %v1621
    %1923 = vmatprep.subr.mxu0 %v1620
    %1924 = vmatpush1.msra.mxu0 %v1619
    %1925 = vmatprep.subr.mxu0 %v1618
    %1926 = vmatpush1.msra.mxu0 %v1617
    %1927 = vmatprep.subr.mxu0 %v1616
    %1928 = vmatpush1.msra.mxu0 %v1615
    %1929 = vmatprep.subr.mxu0 %v1614
    %1930 = vmatpush1.msra.mxu0 %v1613
    %1931 = vmatprep.subr.mxu0 %v1612
    %1932 = vmatpush1.msra.mxu0 %v1611
    %1933 = vmatprep.subr.mxu0 %v1610
    %1934 = vmatpush1.msra.mxu0 %v1609
    %1935 = vmatprep.subr.mxu0 %v1608
    %1936 = vmatpush1.msra.mxu0 %v1607
    %1937 = vmatprep.subr.mxu0 %v1606
    %1938 = vmatpush1.msra.mxu0 %v1605
    %1939 = vmatprep.subr.mxu0 %v1604
    %1940 = vmatpush1.msra.mxu0 %v1603
    %1941 = vmatprep.subr.mxu0 %v1602
    %1942 = vmatpush1.msra.mxu0 %v1601
    %1943 = vmatprep.subr.mxu0 %v1600
    %1944 = vmatpush1.msra.mxu0 %v1599
    %1945 = vmatprep.subr.mxu0 %v1598
    %1946 = vmatpush1.msra.mxu0 %v1597
    %1947 = vmatprep.subr.mxu0 %v1596
    %1948 = vmatpush1.msra.mxu0 %v1595
    %1949 = vmatprep.subr.mxu0 %v1594
    %1950 = vmatpush1.msra.mxu0 %v1593
    %1951 = vmatprep.subr.mxu0 %v1592
    %1952 = vmatpush1.msra.mxu0 %v1591
    %1953 = vmatprep.subr.mxu0 0.0
    %1954 = vmatpush2.msra.mxu0 0.0
    %1955 = vmatprep.subr.mxu0 0.0
    %1956 = vmatpush2.msra.mxu0 0.0
    %1957 = vmatprep.subr.mxu0 0.0
    %1958 = vmatpush2.msra.mxu0 0.0
    %1959 = vmatprep.subr.mxu0 0.0
    %1960 = vmatpush2.msra.mxu0 0.0
    %1961 = vmatprep.subr.mxu0 0.0
    %1962 = vmatpush2.msra.mxu0 0.0
    %1963 = vmatprep.subr.mxu0 0.0
    %1964 = vmatpush2.msra.mxu0 0.0
    %1965 = vmatprep.subr.mxu0 0.0
    %1966 = vmatpush2.msra.mxu0 0.0
    %1967 = vmatprep.subr.mxu0 0.0
    %1968 = vmatpush2.msra.mxu0 0.0
    %1969 = vmatprep.subr.mxu0 0.0
    %1970 = vmatpush2.msra.mxu0 0.0
    %1971 = vmatprep.subr.mxu0 0.0
    %1972 = vmatpush2.msra.mxu0 0.0
    %1973 = vmatprep.subr.mxu0 0.0
    %1974 = vmatpush2.msra.mxu0 0.0
    %1975 = vmatprep.subr.mxu0 0.0
    %1976 = vmatpush2.msra.mxu0 0.0
    %1977 = vmatprep.subr.mxu0 0.0
    %1978 = vmatpush2.msra.mxu0 0.0
    %1979 = vmatprep.subr.mxu0 0.0
    %1980 = vmatpush2.msra.mxu0 0.0
    %1981 = vmatprep.subr.mxu0 0.0
    %1982 = vmatpush2.msra.mxu0 0.0
    %1983 = vmatprep.subr.mxu0 %v627
    %1984 = vmatpush2.msra.mxu0 %v627
    %1985 = vmatprep.mubr.f32.mxu0 %v1672
    %1986 = vmatmul.mubr.f32.gmra.mxu0 %v1627
    %v1987 = vpop.f32.mrf.mxu0
    %v1988 = vadd.f32 %v1875, %v1987
    %v1989 = vpop.f32.mrf.mxu0
    %v1990 = vadd.f32 %v1877, %v1989
    %1991 = vmatprep.mubr.f32.mxu0 %v1675
    %1992 = vmatmul.mubr.f32.gmra.mxu0 %v1633
    %v1993 = vpop.f32.mrf.mxu0
    %v1994 = vadd.f32 %v1881, %v1993
    %v1995 = vpop.f32.mrf.mxu0
    %v1996 = vadd.f32 %v1883, %v1995
    %1997 = vmatprep.mubr.f32.mxu0 %v1678
    %1998 = vmatmul.mubr.f32.gmra.mxu0 %v1639
    %v1999 = vpop.f32.mrf.mxu0
    %v2000 = vadd.f32 %v1887, %v1999
    %v2001 = vpop.f32.mrf.mxu0
    %v2002 = vadd.f32 %v1889, %v2001
    %2003 = vmatprep.mubr.f32.mxu0 %v1681
    %2004 = vmatmul.mubr.f32.gmra.mxu0 %v1645
    %v2005 = vpop.f32.mrf.mxu0
    %v2006 = vadd.f32 %v1893, %v2005
    %v2007 = vpop.f32.mrf.mxu0
    %v2008 = vadd.f32 %v1895, %v2007
    %2009 = vmatprep.mubr.f32.mxu0 %v1684
    %2010 = vmatmul.mubr.f32.gmra.mxu0 %v1651
    %v2011 = vpop.f32.mrf.mxu0
    %v2012 = vadd.f32 %v1899, %v2011
    %v2013 = vpop.f32.mrf.mxu0
    %v2014 = vadd.f32 %v1901, %v2013
    %2015 = vmatprep.mubr.f32.mxu0 %v1687
    %2016 = vmatmul.mubr.f32.gmra.mxu0 %v1657
    %v2017 = vpop.f32.mrf.mxu0
    %v2018 = vadd.f32 %v1905, %v2017
    %v2019 = vpop.f32.mrf.mxu0
    %v2020 = vadd.f32 %v1907, %v2019
    %2021 = vmatprep.mubr.f32.mxu0 %v1690
    %2022 = vmatmul.mubr.f32.gmra.mxu0 %v1663
    %v2023 = vpop.f32.mrf.mxu0
    %v2024 = vadd.f32 %v1911, %v2023
    %v2025 = vpop.f32.mrf.mxu0
    %v2026 = vadd.f32 %v1913, %v2025
    %2027 = vmatprep.mubr.f32.mxu0 %v1693
    %2028 = vmatmul.mubr.f32.gmra.mxu0 %v1669
    %v2029 = vpop.f32.mrf.mxu0
    %v2030 = vadd.f32 %v1917, %v2029
    %v2031 = vpop.f32.mrf.mxu0
    %v2032 = vadd.f32 %v1919, %v2031
    %2033 = vdwg.mxu0
    %v2034 = vmul.f32 %v1988, 0.2
    %v2035 = vmul.f32 %v1990, 0.2
    %v2036 = vmul.f32 %v1994, 0.2
    %v2037 = vmul.f32 %v1996, 0.2
    %v2038 = vmul.f32 %v2000, 0.2
    %v2039 = vmul.f32 %v2002, 0.2
    %v2040 = vmul.f32 %v2006, 0.2
    %v2041 = vmul.f32 %v2008, 0.2
    %v2042 = vmul.f32 %v2012, 0.2
    %v2043 = vmul.f32 %v2014, 0.2
    %v2044 = vmul.f32 %v2018, 0.2
    %v2045 = vmul.f32 %v2020, 0.2
    %v2046 = vmul.f32 %v2024, 0.2
    %v2047 = vmul.f32 %v2026, 0.2
    %v2048 = vmul.f32 %v2030, 0.2
    %v2049 = vmul.f32 %v2032, 0.2
    %v2050 = vmax.f32 %v1988, %v2034
    %v2051 = vmax.f32 %v1990, %v2035
    %v2052 = vmax.f32 %v1994, %v2036
    %v2053 = vmax.f32 %v1996, %v2037
    %v2054 = vmax.f32 %v2000, %v2038
    %v2055 = vmax.f32 %v2002, %v2039
    %v2056 = vmax.f32 %v2006, %v2040
    %v2057 = vmax.f32 %v2008, %v2041
    %v2058 = vmax.f32 %v2012, %v2042
    %v2059 = vmax.f32 %v2014, %v2043
    %v2060 = vmax.f32 %v2018, %v2044
    %v2061 = vmax.f32 %v2020, %v2045
    %v2062 = vmax.f32 %v2024, %v2046
    %v2063 = vmax.f32 %v2026, %v2047
    %v2064 = vmax.f32 %v2030, %v2048
    %v2065 = vmax.f32 %v2032, %v2049
    %2066 = vrot.lane.b32.xlu0 %v2050, 3
    %v2067 = vpop.permute.xlu0 %2066
    %2068 = vrot.lane.b32.xlu0 %v2052, 3
    %v2069 = vpop.permute.xlu0 %2068
    %2070 = vrot.lane.b32.xlu0 %v2054, 3
    %v2071 = vpop.permute.xlu0 %2070
    %2072 = vrot.lane.b32.xlu0 %v2056, 3
    %v2073 = vpop.permute.xlu0 %2072
    %2074 = vrot.lane.b32.xlu0 %v2058, 3
    %v2075 = vpop.permute.xlu0 %2074
    %2076 = vrot.lane.b32.xlu0 %v2060, 3
    %v2077 = vpop.permute.xlu0 %2076
    %2078 = vrot.lane.b32.xlu0 %v2062, 3
    %v2079 = vpop.permute.xlu0 %2078
    %2080 = vrot.lane.b32.xlu0 %v2064, 3
    %v2081 = vpop.permute.xlu0 %2080
    %2082 = vrot.lane.b32.xlu0 %v2051, 3
    %v2083 = vpop.permute.xlu0 %2082
    %2084 = vrot.lane.b32.xlu0 %v2053, 3
    %v2085 = vpop.permute.xlu0 %2084
    %2086 = vrot.lane.b32.xlu0 %v2055, 3
    %v2087 = vpop.permute.xlu0 %2086
    %2088 = vrot.lane.b32.xlu0 %v2057, 3
    %v2089 = vpop.permute.xlu0 %2088
    %2090 = vrot.lane.b32.xlu0 %v2059, 3
    %v2091 = vpop.permute.xlu0 %2090
    %2092 = vrot.lane.b32.xlu0 %v2061, 3
    %v2093 = vpop.permute.xlu0 %2092
    %2094 = vrot.lane.b32.xlu0 %v2063, 3
    %v2095 = vpop.permute.xlu0 %2094
    %2096 = vrot.lane.b32.xlu0 %v2065, 3
    %v2097 = vpop.permute.xlu0 %2096
    %v2098 = vsel %vm76, %v2067, %v2083
    %v2099 = vsel %vm76, %v2069, %v2085
    %v2100 = vsel %vm76, %v2071, %v2087
    %v2101 = vsel %vm76, %v2073, %v2089
    %v2102 = vsel %vm76, %v2075, %v2091
    %v2103 = vsel %vm76, %v2077, %v2093
    %v2104 = vsel %vm76, %v2079, %v2095
    %v2105 = vsel %vm76, %v2081, %v2097
    %v2106 = vsel %vm76, %v2083, %v2067
    %v2107 = vsel %vm76, %v2085, %v2069
    %v2108 = vsel %vm76, %v2087, %v2071
    %v2109 = vsel %vm76, %v2089, %v2073
    %v2110 = vsel %vm76, %v2091, %v2075
    %v2111 = vsel %vm76, %v2093, %v2077
    %v2112 = vsel %vm76, %v2095, %v2079
    %v2113 = vsel %vm76, %v2097, %v2081
    %v2114 = vsel %vm59, 1, 0
    %v2115 = vsel %vm60, 1, 0
    %vm2116 = vcmp.eq.s32.totalorder %v2114, 1
    %vm2117 = vcmp.eq.s32.totalorder %v2115, 1
    %v2118 = vsel %vm2116, %v2106, 0.0
    %v2119 = vsel %vm2117, %v2098, 0.0
    %v2120 = vsel %vm2116, %v2107, 0.0
    %v2121 = vsel %vm2117, %v2099, 0.0
    %v2122 = vsel %vm2116, %v2108, 0.0
    %v2123 = vsel %vm2117, %v2100, 0.0
    %v2124 = vsel %vm2116, %v2109, 0.0
    %v2125 = vsel %vm2117, %v2101, 0.0
    %v2126 = vsel %vm2116, %v2110, 0.0
    %v2127 = vsel %vm2117, %v2102, 0.0
    %v2128 = vsel %vm2116, %v2111, 0.0
    %v2129 = vsel %vm2117, %v2103, 0.0
    %v2130 = vsel %vm2116, %v2112, 0.0
    %v2131 = vsel %vm2117, %v2104, 0.0
    %v2132 = vsel %vm2116, %v2113, 0.0
    %v2133 = vsel %vm2117, %v2105, 0.0
    %2134 = vrot.lane.b32.xlu0 %v2050, 2
    %v2135 = vpop.permute.xlu0 %2134
    %2136 = vrot.lane.b32.xlu0 %v2052, 2
    %v2137 = vpop.permute.xlu0 %2136
    %2138 = vrot.lane.b32.xlu0 %v2054, 2
    %v2139 = vpop.permute.xlu0 %2138
    %2140 = vrot.lane.b32.xlu0 %v2056, 2
    %v2141 = vpop.permute.xlu0 %2140
    %2142 = vrot.lane.b32.xlu0 %v2058, 2
    %v2143 = vpop.permute.xlu0 %2142
    %2144 = vrot.lane.b32.xlu0 %v2060, 2
    %v2145 = vpop.permute.xlu0 %2144
    %2146 = vrot.lane.b32.xlu0 %v2062, 2
    %v2147 = vpop.permute.xlu0 %2146
    %2148 = vrot.lane.b32.xlu0 %v2064, 2
    %v2149 = vpop.permute.xlu0 %2148
    %2150 = vrot.lane.b32.xlu0 %v2051, 2
    %v2151 = vpop.permute.xlu0 %2150
    %2152 = vrot.lane.b32.xlu0 %v2053, 2
    %v2153 = vpop.permute.xlu0 %2152
    %2154 = vrot.lane.b32.xlu0 %v2055, 2
    %v2155 = vpop.permute.xlu0 %2154
    %2156 = vrot.lane.b32.xlu0 %v2057, 2
    %v2157 = vpop.permute.xlu0 %2156
    %2158 = vrot.lane.b32.xlu0 %v2059, 2
    %v2159 = vpop.permute.xlu0 %2158
    %2160 = vrot.lane.b32.xlu0 %v2061, 2
    %v2161 = vpop.permute.xlu0 %2160
    %2162 = vrot.lane.b32.xlu0 %v2063, 2
    %v2163 = vpop.permute.xlu0 %2162
    %2164 = vrot.lane.b32.xlu0 %v2065, 2
    %v2165 = vpop.permute.xlu0 %2164
    %v2166 = vsel %vm85, %v2135, %v2151
    %v2167 = vsel %vm85, %v2137, %v2153
    %v2168 = vsel %vm85, %v2139, %v2155
    %v2169 = vsel %vm85, %v2141, %v2157
    %v2170 = vsel %vm85, %v2143, %v2159
    %v2171 = vsel %vm85, %v2145, %v2161
    %v2172 = vsel %vm85, %v2147, %v2163
    %v2173 = vsel %vm85, %v2149, %v2165
    %v2174 = vsel %vm85, %v2151, %v2135
    %v2175 = vsel %vm85, %v2153, %v2137
    %v2176 = vsel %vm85, %v2155, %v2139
    %v2177 = vsel %vm85, %v2157, %v2141
    %v2178 = vsel %vm85, %v2159, %v2143
    %v2179 = vsel %vm85, %v2161, %v2145
    %v2180 = vsel %vm85, %v2163, %v2147
    %v2181 = vsel %vm85, %v2165, %v2149
    %v2182 = vsel %vm405, %v2174, 0.0
    %v2183 = vsel %vm406, %v2166, 0.0
    %v2184 = vsel %vm405, %v2175, 0.0
    %v2185 = vsel %vm406, %v2167, 0.0
    %v2186 = vsel %vm405, %v2176, 0.0
    %v2187 = vsel %vm406, %v2168, 0.0
    %v2188 = vsel %vm405, %v2177, 0.0
    %v2189 = vsel %vm406, %v2169, 0.0
    %v2190 = vsel %vm405, %v2178, 0.0
    %v2191 = vsel %vm406, %v2170, 0.0
    %v2192 = vsel %vm405, %v2179, 0.0
    %v2193 = vsel %vm406, %v2171, 0.0
    %v2194 = vsel %vm405, %v2180, 0.0
    %v2195 = vsel %vm406, %v2172, 0.0
    %v2196 = vsel %vm405, %v2181, 0.0
    %v2197 = vsel %vm406, %v2173, 0.0
    %2198 = vrot.lane.b32.xlu0 %v2050, 1
    %v2199 = vpop.permute.xlu0 %2198
    %2200 = vrot.lane.b32.xlu0 %v2052, 1
    %v2201 = vpop.permute.xlu0 %2200
    %2202 = vrot.lane.b32.xlu0 %v2054, 1
    %v2203 = vpop.permute.xlu0 %2202
    %2204 = vrot.lane.b32.xlu0 %v2056, 1
    %v2205 = vpop.permute.xlu0 %2204
    %2206 = vrot.lane.b32.xlu0 %v2058, 1
    %v2207 = vpop.permute.xlu0 %2206
    %2208 = vrot.lane.b32.xlu0 %v2060, 1
    %v2209 = vpop.permute.xlu0 %2208
    %2210 = vrot.lane.b32.xlu0 %v2062, 1
    %v2211 = vpop.permute.xlu0 %2210
    %2212 = vrot.lane.b32.xlu0 %v2064, 1
    %v2213 = vpop.permute.xlu0 %2212
    %2214 = vrot.lane.b32.xlu0 %v2051, 1
    %v2215 = vpop.permute.xlu0 %2214
    %2216 = vrot.lane.b32.xlu0 %v2053, 1
    %v2217 = vpop.permute.xlu0 %2216
    %2218 = vrot.lane.b32.xlu0 %v2055, 1
    %v2219 = vpop.permute.xlu0 %2218
    %2220 = vrot.lane.b32.xlu0 %v2057, 1
    %v2221 = vpop.permute.xlu0 %2220
    %2222 = vrot.lane.b32.xlu0 %v2059, 1
    %v2223 = vpop.permute.xlu0 %2222
    %2224 = vrot.lane.b32.xlu0 %v2061, 1
    %v2225 = vpop.permute.xlu0 %2224
    %2226 = vrot.lane.b32.xlu0 %v2063, 1
    %v2227 = vpop.permute.xlu0 %2226
    %2228 = vrot.lane.b32.xlu0 %v2065, 1
    %v2229 = vpop.permute.xlu0 %2228
    %v2230 = vsel %vm94, %v2199, %v2215
    %v2231 = vsel %vm94, %v2201, %v2217
    %v2232 = vsel %vm94, %v2203, %v2219
    %v2233 = vsel %vm94, %v2205, %v2221
    %v2234 = vsel %vm94, %v2207, %v2223
    %v2235 = vsel %vm94, %v2209, %v2225
    %v2236 = vsel %vm94, %v2211, %v2227
    %v2237 = vsel %vm94, %v2213, %v2229
    %v2238 = vsel %vm94, %v2215, %v2199
    %v2239 = vsel %vm94, %v2217, %v2201
    %v2240 = vsel %vm94, %v2219, %v2203
    %v2241 = vsel %vm94, %v2221, %v2205
    %v2242 = vsel %vm94, %v2223, %v2207
    %v2243 = vsel %vm94, %v2225, %v2209
    %v2244 = vsel %vm94, %v2227, %v2211
    %v2245 = vsel %vm94, %v2229, %v2213
    %v2246 = vsel %vm473, %v2238, 0.0
    %v2247 = vsel %vm474, %v2230, 0.0
    %v2248 = vsel %vm473, %v2239, 0.0
    %v2249 = vsel %vm474, %v2231, 0.0
    %v2250 = vsel %vm473, %v2240, 0.0
    %v2251 = vsel %vm474, %v2232, 0.0
    %v2252 = vsel %vm473, %v2241, 0.0
    %v2253 = vsel %vm474, %v2233, 0.0
    %v2254 = vsel %vm473, %v2242, 0.0
    %v2255 = vsel %vm474, %v2234, 0.0
    %v2256 = vsel %vm473, %v2243, 0.0
    %v2257 = vsel %vm474, %v2235, 0.0
    %v2258 = vsel %vm473, %v2244, 0.0
    %v2259 = vsel %vm474, %v2236, 0.0
    %v2260 = vsel %vm473, %v2245, 0.0
    %v2261 = vsel %vm474, %v2237, 0.0
    %2262 = vrot.lane.b32.xlu0 %v2050, 127
    %v2263 = vpop.permute.xlu0 %2262
    %2264 = vrot.lane.b32.xlu0 %v2052, 127
    %v2265 = vpop.permute.xlu0 %2264
    %2266 = vrot.lane.b32.xlu0 %v2054, 127
    %v2267 = vpop.permute.xlu0 %2266
    %2268 = vrot.lane.b32.xlu0 %v2056, 127
    %v2269 = vpop.permute.xlu0 %2268
    %2270 = vrot.lane.b32.xlu0 %v2058, 127
    %v2271 = vpop.permute.xlu0 %2270
    %2272 = vrot.lane.b32.xlu0 %v2060, 127
    %v2273 = vpop.permute.xlu0 %2272
    %2274 = vrot.lane.b32.xlu0 %v2062, 127
    %v2275 = vpop.permute.xlu0 %2274
    %2276 = vrot.lane.b32.xlu0 %v2064, 127
    %v2277 = vpop.permute.xlu0 %2276
    %2278 = vrot.lane.b32.xlu0 %v2051, 127
    %v2279 = vpop.permute.xlu0 %2278
    %2280 = vrot.lane.b32.xlu0 %v2053, 127
    %v2281 = vpop.permute.xlu0 %2280
    %2282 = vrot.lane.b32.xlu0 %v2055, 127
    %v2283 = vpop.permute.xlu0 %2282
    %2284 = vrot.lane.b32.xlu0 %v2057, 127
    %v2285 = vpop.permute.xlu0 %2284
    %2286 = vrot.lane.b32.xlu0 %v2059, 127
    %v2287 = vpop.permute.xlu0 %2286
    %2288 = vrot.lane.b32.xlu0 %v2061, 127
    %v2289 = vpop.permute.xlu0 %2288
    %2290 = vrot.lane.b32.xlu0 %v2063, 127
    %v2291 = vpop.permute.xlu0 %2290
    %2292 = vrot.lane.b32.xlu0 %v2065, 127
    %v2293 = vpop.permute.xlu0 %2292
    %v2294 = vsel %vm103, %v2263, %v2279
    %v2295 = vsel %vm103, %v2265, %v2281
    %v2296 = vsel %vm103, %v2267, %v2283
    %v2297 = vsel %vm103, %v2269, %v2285
    %v2298 = vsel %vm103, %v2271, %v2287
    %v2299 = vsel %vm103, %v2273, %v2289
    %v2300 = vsel %vm103, %v2275, %v2291
    %v2301 = vsel %vm103, %v2277, %v2293
    %v2302 = vsel %vm103, %v2279, %v2263
    %v2303 = vsel %vm103, %v2281, %v2265
    %v2304 = vsel %vm103, %v2283, %v2267
    %v2305 = vsel %vm103, %v2285, %v2269
    %v2306 = vsel %vm103, %v2287, %v2271
    %v2307 = vsel %vm103, %v2289, %v2273
    %v2308 = vsel %vm103, %v2291, %v2275
    %v2309 = vsel %vm103, %v2293, %v2277
    %v2310 = vsel %vm541, %v2294, 0.0
    %v2311 = vsel %vm542, %v2302, 0.0
    %v2312 = vsel %vm541, %v2295, 0.0
    %v2313 = vsel %vm542, %v2303, 0.0
    %v2314 = vsel %vm541, %v2296, 0.0
    %v2315 = vsel %vm542, %v2304, 0.0
    %v2316 = vsel %vm541, %v2297, 0.0
    %v2317 = vsel %vm542, %v2305, 0.0
    %v2318 = vsel %vm541, %v2298, 0.0
    %v2319 = vsel %vm542, %v2306, 0.0
    %v2320 = vsel %vm541, %v2299, 0.0
    %v2321 = vsel %vm542, %v2307, 0.0
    %v2322 = vsel %vm541, %v2300, 0.0
    %v2323 = vsel %vm542, %v2308, 0.0
    %v2324 = vsel %vm541, %v2301, 0.0
    %v2325 = vsel %vm542, %v2309, 0.0
    %2326 = vrot.lane.b32.xlu0 %v2050, 126
    %v2327 = vpop.permute.xlu0 %2326
    %2328 = vrot.lane.b32.xlu0 %v2052, 126
    %v2329 = vpop.permute.xlu0 %2328
    %2330 = vrot.lane.b32.xlu0 %v2054, 126
    %v2331 = vpop.permute.xlu0 %2330
    %2332 = vrot.lane.b32.xlu0 %v2056, 126
    %v2333 = vpop.permute.xlu0 %2332
    %2334 = vrot.lane.b32.xlu0 %v2058, 126
    %v2335 = vpop.permute.xlu0 %2334
    %2336 = vrot.lane.b32.xlu0 %v2060, 126
    %v2337 = vpop.permute.xlu0 %2336
    %2338 = vrot.lane.b32.xlu0 %v2062, 126
    %v2339 = vpop.permute.xlu0 %2338
    %2340 = vrot.lane.b32.xlu0 %v2064, 126
    %v2341 = vpop.permute.xlu0 %2340
    %2342 = vrot.lane.b32.xlu0 %v2051, 126
    %v2343 = vpop.permute.xlu0 %2342
    %2344 = vrot.lane.b32.xlu0 %v2053, 126
    %v2345 = vpop.permute.xlu0 %2344
    %2346 = vrot.lane.b32.xlu0 %v2055, 126
    %v2347 = vpop.permute.xlu0 %2346
    %2348 = vrot.lane.b32.xlu0 %v2057, 126
    %v2349 = vpop.permute.xlu0 %2348
    %2350 = vrot.lane.b32.xlu0 %v2059, 126
    %v2351 = vpop.permute.xlu0 %2350
    %2352 = vrot.lane.b32.xlu0 %v2061, 126
    %v2353 = vpop.permute.xlu0 %2352
    %2354 = vrot.lane.b32.xlu0 %v2063, 126
    %v2355 = vpop.permute.xlu0 %2354
    %2356 = vrot.lane.b32.xlu0 %v2065, 126
    %v2357 = vpop.permute.xlu0 %2356
    %v2358 = vsel %vm112, %v2327, %v2343
    %v2359 = vsel %vm112, %v2329, %v2345
    %v2360 = vsel %vm112, %v2331, %v2347
    %v2361 = vsel %vm112, %v2333, %v2349
    %v2362 = vsel %vm112, %v2335, %v2351
    %v2363 = vsel %vm112, %v2337, %v2353
    %v2364 = vsel %vm112, %v2339, %v2355
    %v2365 = vsel %vm112, %v2341, %v2357
    %v2366 = vsel %vm112, %v2343, %v2327
    %v2367 = vsel %vm112, %v2345, %v2329
    %v2368 = vsel %vm112, %v2347, %v2331
    %v2369 = vsel %vm112, %v2349, %v2333
    %v2370 = vsel %vm112, %v2351, %v2335
    %v2371 = vsel %vm112, %v2353, %v2337
    %v2372 = vsel %vm112, %v2355, %v2339
    %v2373 = vsel %vm112, %v2357, %v2341
    %v2374 = vsel %vm609, %v2358, 0.0
    %v2375 = vsel %vm610, %v2366, 0.0
    %v2376 = vsel %vm609, %v2359, 0.0
    %v2377 = vsel %vm610, %v2367, 0.0
    %v2378 = vsel %vm609, %v2360, 0.0
    %v2379 = vsel %vm610, %v2368, 0.0
    %v2380 = vsel %vm609, %v2361, 0.0
    %v2381 = vsel %vm610, %v2369, 0.0
    %v2382 = vsel %vm609, %v2362, 0.0
    %v2383 = vsel %vm610, %v2370, 0.0
    %v2384 = vsel %vm609, %v2363, 0.0
    %v2385 = vsel %vm610, %v2371, 0.0
    %v2386 = vsel %vm609, %v2364, 0.0
    %v2387 = vsel %vm610, %v2372, 0.0
    %v2388 = vsel %vm609, %v2365, 0.0
    %v2389 = vsel %vm610, %v2373, 0.0
    %2390 = vrot.lane.b32.xlu0 %v2050, 125
    %v2391 = vpop.permute.xlu0 %2390
    %2392 = vrot.lane.b32.xlu0 %v2052, 125
    %v2393 = vpop.permute.xlu0 %2392
    %2394 = vrot.lane.b32.xlu0 %v2054, 125
    %v2395 = vpop.permute.xlu0 %2394
    %2396 = vrot.lane.b32.xlu0 %v2056, 125
    %v2397 = vpop.permute.xlu0 %2396
    %2398 = vrot.lane.b32.xlu0 %v2058, 125
    %v2399 = vpop.permute.xlu0 %2398
    %2400 = vrot.lane.b32.xlu0 %v2060, 125
    %v2401 = vpop.permute.xlu0 %2400
    %2402 = vrot.lane.b32.xlu0 %v2062, 125
    %v2403 = vpop.permute.xlu0 %2402
    %2404 = vrot.lane.b32.xlu0 %v2064, 125
    %v2405 = vpop.permute.xlu0 %2404
    %2406 = vrot.lane.b32.xlu0 %v2051, 125
    %v2407 = vpop.permute.xlu0 %2406
    %2408 = vrot.lane.b32.xlu0 %v2053, 125
    %v2409 = vpop.permute.xlu0 %2408
    %2410 = vrot.lane.b32.xlu0 %v2055, 125
    %v2411 = vpop.permute.xlu0 %2410
    %2412 = vrot.lane.b32.xlu0 %v2057, 125
    %v2413 = vpop.permute.xlu0 %2412
    %2414 = vrot.lane.b32.xlu0 %v2059, 125
    %v2415 = vpop.permute.xlu0 %2414
    %2416 = vrot.lane.b32.xlu0 %v2061, 125
    %v2417 = vpop.permute.xlu0 %2416
    %2418 = vrot.lane.b32.xlu0 %v2063, 125
    %v2419 = vpop.permute.xlu0 %2418
    %2420 = vrot.lane.b32.xlu0 %v2065, 125
    %v2421 = vpop.permute.xlu0 %2420
    %v2422 = vsel %vm121, %v2391, %v2407
    %v2423 = vsel %vm121, %v2393, %v2409
    %v2424 = vsel %vm121, %v2395, %v2411
    %v2425 = vsel %vm121, %v2397, %v2413
    %v2426 = vsel %vm121, %v2399, %v2415
    %v2427 = vsel %vm121, %v2401, %v2417
    %v2428 = vsel %vm121, %v2403, %v2419
    %v2429 = vsel %vm121, %v2405, %v2421
    %v2430 = vsel %vm121, %v2407, %v2391
    %v2431 = vsel %vm121, %v2409, %v2393
    %v2432 = vsel %vm121, %v2411, %v2395
    %v2433 = vsel %vm121, %v2413, %v2397
    %v2434 = vsel %vm121, %v2415, %v2399
    %v2435 = vsel %vm121, %v2417, %v2401
    %v2436 = vsel %vm121, %v2419, %v2403
    %v2437 = vsel %vm121, %v2421, %v2405
    %v2438 = vsel %vm57, 1, 0
    %v2439 = vsel %vm58, 1, 0
    %vm2440 = vcmp.eq.s32.totalorder %v2438, 1
    %vm2441 = vcmp.eq.s32.totalorder %v2439, 1
    %v2442 = vsel %vm2440, %v2422, 0.0
    %v2443 = vsel %vm2441, %v2430, 0.0
    %v2444 = vsel %vm2440, %v2423, 0.0
    %v2445 = vsel %vm2441, %v2431, 0.0
    %v2446 = vsel %vm2440, %v2424, 0.0
    %v2447 = vsel %vm2441, %v2432, 0.0
    %v2448 = vsel %vm2440, %v2425, 0.0
    %v2449 = vsel %vm2441, %v2433, 0.0
    %v2450 = vsel %vm2440, %v2426, 0.0
    %v2451 = vsel %vm2441, %v2434, 0.0
    %v2452 = vsel %vm2440, %v2427, 0.0
    %v2453 = vsel %vm2441, %v2435, 0.0
    %v2454 = vsel %vm2440, %v2428, 0.0
    %v2455 = vsel %vm2441, %v2436, 0.0
    %v2456 = vsel %vm2440, %v2429, 0.0
    %v2457 = vsel %vm2441, %v2437, 0.0
    %v2458 = vld [vmem:[%s4] sm:$0xff]
    %v2459 = vld [vmem:[%s4 + $0x8] sm:$0xff]
    %v2460 = vld [vmem:[%s4 + $0x10] sm:$0xff]
    %v2461 = vld [vmem:[%s4 + $0x18] sm:$0xff]
    %v2463 = vsel %vm676, %v2461, 0
    %2465 = vmatprep.subr.mxu0 %v2197
    %2466 = vmatpush1.msra.mxu0 %v2196
    %2467 = vmatprep.subr.mxu0 %v2195
    %2468 = vmatpush1.msra.mxu0 %v2194
    %2469 = vmatprep.subr.mxu0 %v2193
    %2470 = vmatpush1.msra.mxu0 %v2192
    %2471 = vmatprep.subr.mxu0 %v2191
    %2472 = vmatpush1.msra.mxu0 %v2190
    %2473 = vmatprep.subr.mxu0 %v2189
    %2474 = vmatpush1.msra.mxu0 %v2188
    %2475 = vmatprep.subr.mxu0 %v2187
    %2476 = vmatpush1.msra.mxu0 %v2186
    %2477 = vmatprep.subr.mxu0 %v2185
    %2478 = vmatpush1.msra.mxu0 %v2184
    %2479 = vmatprep.subr.mxu0 %v2183
    %2480 = vmatpush1.msra.mxu0 %v2182
    %2481 = vmatprep.subr.mxu0 %v2133
    %2482 = vmatpush1.msra.mxu0 %v2132
    %2483 = vmatprep.subr.mxu0 %v2131
    %2484 = vmatpush1.msra.mxu0 %v2130
    %2485 = vmatprep.subr.mxu0 %v2129
    %2486 = vmatpush1.msra.mxu0 %v2128
    %2487 = vmatprep.subr.mxu0 %v2127
    %2488 = vmatpush1.msra.mxu0 %v2126
    %2489 = vmatprep.subr.mxu0 %v2125
    %2490 = vmatpush1.msra.mxu0 %v2124
    %2491 = vmatprep.subr.mxu0 %v2123
    %2492 = vmatpush1.msra.mxu0 %v2122
    %2493 = vmatprep.subr.mxu0 %v2121
    %2494 = vmatpush1.msra.mxu0 %v2120
    %2495 = vmatprep.subr.mxu0 %v2119
    %2496 = vmatpush1.msra.mxu0 %v2118
    %2497 = vmatprep.subr.mxu0 %v2065
    %2498 = vmatpush2.msra.mxu0 %v2064
    %2499 = vmatprep.subr.mxu0 %v2063
    %2500 = vmatpush2.msra.mxu0 %v2062
    %2501 = vmatprep.subr.mxu0 %v2061
    %2502 = vmatpush2.msra.mxu0 %v2060
    %2503 = vmatprep.subr.mxu0 %v2059
    %2504 = vmatpush2.msra.mxu0 %v2058
    %2505 = vmatprep.subr.mxu0 %v2057
    %2506 = vmatpush2.msra.mxu0 %v2056
    %2507 = vmatprep.subr.mxu0 %v2055
    %2508 = vmatpush2.msra.mxu0 %v2054
    %2509 = vmatprep.subr.mxu0 %v2053
    %2510 = vmatpush2.msra.mxu0 %v2052
    %2511 = vmatprep.subr.mxu0 %v2051
    %2512 = vmatpush2.msra.mxu0 %v2050
    %2513 = vmatprep.subr.mxu0 %v2261
    %2514 = vmatpush2.msra.mxu0 %v2260
    %2515 = vmatprep.subr.mxu0 %v2259
    %2516 = vmatpush2.msra.mxu0 %v2258
    %2517 = vmatprep.subr.mxu0 %v2257
    %2518 = vmatpush2.msra.mxu0 %v2256
    %2519 = vmatprep.subr.mxu0 %v2255
    %2520 = vmatpush2.msra.mxu0 %v2254
    %2521 = vmatprep.subr.mxu0 %v2253
    %2522 = vmatpush2.msra.mxu0 %v2252
    %2523 = vmatprep.subr.mxu0 %v2251
    %2524 = vmatpush2.msra.mxu0 %v2250
    %2525 = vmatprep.subr.mxu0 %v2249
    %2526 = vmatpush2.msra.mxu0 %v2248
    %2527 = vmatprep.subr.mxu0 %v2247
    %2528 = vmatpush2.msra.mxu0 %v2246
    %2529 = vmatprep.mubr.f32.mxu0 %v2459
    %2530 = vmatmul.mubr.f32.gmra.mxu0 %v2458
    %v2531 = vpop.f32.mrf.mxu0
    %v2532 = vadd.f32 0.0, %v2531
    %v2533 = vpop.f32.mrf.mxu0
    %v2534 = vadd.f32 0.0, %v2533
    %2535 = vdwg.mxu0
    %2536 = vmatprep.subr.mxu0 %v2389
    %2537 = vmatpush1.msra.mxu0 %v2388
    %2538 = vmatprep.subr.mxu0 %v2387
    %2539 = vmatpush1.msra.mxu0 %v2386
    %2540 = vmatprep.subr.mxu0 %v2385
    %2541 = vmatpush1.msra.mxu0 %v2384
    %2542 = vmatprep.subr.mxu0 %v2383
    %2543 = vmatpush1.msra.mxu0 %v2382
    %2544 = vmatprep.subr.mxu0 %v2381
    %2545 = vmatpush1.msra.mxu0 %v2380
    %2546 = vmatprep.subr.mxu0 %v2379
    %2547 = vmatpush1.msra.mxu0 %v2378
    %2548 = vmatprep.subr.mxu0 %v2377
    %2549 = vmatpush1.msra.mxu0 %v2376
    %2550 = vmatprep.subr.mxu0 %v2375
    %2551 = vmatpush1.msra.mxu0 %v2374
    %2552 = vmatprep.subr.mxu0 %v2325
    %2553 = vmatpush1.msra.mxu0 %v2324
    %2554 = vmatprep.subr.mxu0 %v2323
    %2555 = vmatpush1.msra.mxu0 %v2322
    %2556 = vmatprep.subr.mxu0 %v2321
    %2557 = vmatpush1.msra.mxu0 %v2320
    %2558 = vmatprep.subr.mxu0 %v2319
    %2559 = vmatpush1.msra.mxu0 %v2318
    %2560 = vmatprep.subr.mxu0 %v2317
    %2561 = vmatpush1.msra.mxu0 %v2316
    %2562 = vmatprep.subr.mxu0 %v2315
    %2563 = vmatpush1.msra.mxu0 %v2314
    %2564 = vmatprep.subr.mxu0 %v2313
    %2565 = vmatpush1.msra.mxu0 %v2312
    %2566 = vmatprep.subr.mxu0 %v2311
    %2567 = vmatpush1.msra.mxu0 %v2310
    %2568 = vmatprep.subr.mxu0 0.0
    %2569 = vmatpush2.msra.mxu0 0.0
    %2570 = vmatprep.subr.mxu0 0.0
    %2571 = vmatpush2.msra.mxu0 0.0
    %2572 = vmatprep.subr.mxu0 0.0
    %2573 = vmatpush2.msra.mxu0 0.0
    %2574 = vmatprep.subr.mxu0 0.0
    %2575 = vmatpush2.msra.mxu0 0.0
    %2576 = vmatprep.subr.mxu0 0.0
    %2577 = vmatpush2.msra.mxu0 0.0
    %2578 = vmatprep.subr.mxu0 0.0
    %2579 = vmatpush2.msra.mxu0 0.0
    %2580 = vmatprep.subr.mxu0 0.0
    %2581 = vmatpush2.msra.mxu0 0.0
    %2582 = vmatprep.subr.mxu0 %v627
    %2583 = vmatpush2.msra.mxu0 %v627
    %2584 = vmatprep.subr.mxu0 %v2457
    %2585 = vmatpush2.msra.mxu0 %v2456
    %2586 = vmatprep.subr.mxu0 %v2455
    %2587 = vmatpush2.msra.mxu0 %v2454
    %2588 = vmatprep.subr.mxu0 %v2453
    %2589 = vmatpush2.msra.mxu0 %v2452
    %2590 = vmatprep.subr.mxu0 %v2451
    %2591 = vmatpush2.msra.mxu0 %v2450
    %2592 = vmatprep.subr.mxu0 %v2449
    %2593 = vmatpush2.msra.mxu0 %v2448
    %2594 = vmatprep.subr.mxu0 %v2447
    %2595 = vmatpush2.msra.mxu0 %v2446
    %2596 = vmatprep.subr.mxu0 %v2445
    %2597 = vmatpush2.msra.mxu0 %v2444
    %2598 = vmatprep.subr.mxu0 %v2443
    %2599 = vmatpush2.msra.mxu0 %v2442
    %2600 = vmatprep.mubr.f32.mxu0 %v2463
    %2601 = vmatmul.mubr.f32.gmra.mxu0 %v2460
    %v2602 = vpop.f32.mrf.mxu0
    %v2603 = vadd.f32 %v2532, %v2602
    %v2604 = vpop.f32.mrf.mxu0
    %v2605 = vadd.f32 %v2534, %v2604
    %2606 = vdwg.mxu0
    %v2609 = vcombine.low %v2603, %v2605
    %v2611 = vunpack.c.l.s4 1966171168
    %v2612 = vunpack.c.0.s8 %v2611
    %v2613 = vlaneseq
    %v2614 = vshrl.u32 %v2613, 7
    %v2615 = vsub.s32 %v2612, %v2614
    %v2616 = vrot.slane %v2609, %v2615
    %v2618 = vunpack.c.l.s4 1966171168
    %v2619 = vunpack.c.0.s8 %v2618
    %v2620 = vlaneseq
    %v2621 = vshrl.u32 %v2620, 7
    %v2622 = vsub.s32 %v2619, %v2621
    %v2623 = vrot.slane %v2616, %v2622
    %v2625 = vlaneseq
    %vm2626 = vcmp.ge.s32.totalorder %v2625, 0
    %vm2627 = vcmp.lt.s32.totalorder %v2625, 256
    %vm2628 = vmand %vm2626, %vm2627
    %2629 = vst.msk [vmem:[#allocation2] sm:$0x3] %vm2628, %v2623
    // Predicated region
    $region22: #{tpu_custom_call.1} parent=1 // pred_check
      _
    $region23: #{tpu_custom_call.1} parent=1 // pred_check_branch
      %2631 = sbr.rel (0) target = $region25
    $region24: #{tpu_custom_call.1} parent=1 // pred_region
      %s2633 = ssub.s32 32, 32
      %2634 = vsyncadd [#allocation3], %s2633
      %s2636 = sshll.u32 [#allocation2], 4
      %s2637 = int_to_ptr.vmem [resolvable:$true] %s2636
      %2639 = dma.vmem_to_hbm [thread:$0]  %s2637, 32, %s5, [#allocation3]
    $region25: #{tpu_custom_call.1} parent=1 // pred_fallthru
      _
    // Predicated region
    $region26: #{tpu_custom_call.1} parent=1 // pred_check
      _
    $region27: #{tpu_custom_call.1} parent=1 // pred_check_branch
      %2641 = sbr.rel (0) target = $region29
    $region28: #{tpu_custom_call.1} parent=1 // pred_region
      %2642 = dma.done [#allocation3], 32
    $region29: #{tpu_custom_call.1} parent=1 // pred_fallthru
      _
    %2643 = vsyncpa [#allocation3], 1

</llo_original>
